<compile_context>
chip_gen: v5e
topology: v5e:2x2
jax: 0.10.0
libtpu: 0.0.40
codegen_flags: <defaults>
</compile_context>

<pallas_src>
import functools

import jax
import jax.numpy as jnp
from jax.experimental import pallas as pl
from jax.experimental.pallas import tpu as pltpu


def _layernorm(x, gamma, beta, eps=1e-5):
    mean = jnp.mean(x, axis=-1, keepdims=True)
    var = jnp.mean((x - mean) ** 2, axis=-1, keepdims=True)
    return (x - mean) * jax.lax.rsqrt(var + eps) * gamma + beta


def hgakt_kernel(
    x_ref,              # (S, E)  bf16  qa-embedding + positional embedding
    qx_ref,             # (S, E)  bf16  q-embedding of exercises
    w2t_ref, b2_ref,    # query pre-projection   (E, E) bf16, (1, E) f32
    wqh_ref, bqh_ref,   # per-head q in-proj     (H, E, Dh) bf16, (H, 1, Dh) f32 (scale folded)
    wkh_ref, bkh_ref,   # per-head fused k proj  (H, E, Dh) bf16, (H, 1, Dh) f32
    wvh_ref, bvh_ref,   # per-head fused v proj  (H, E, Dh) bf16, (H, 1, Dh) f32
    woh_ref, bo_ref,    # per-head out-proj      (H, Dh, E) bf16, (1, E) f32
    g1_ref, be1_ref,    # layer_norm1            (1, E) f32
    wf0t_ref, bf0_ref,  # ffn[0]                 (E, E) bf16, (1, E) f32
    wf1t_ref, bf1_ref,  # ffn[1]                 (E, E) bf16, (1, E) f32
    g2_ref, be2_ref,    # layer_norm2            (1, E) f32
    wlo_ref, blo_ref,   # linear_out row (1, E) f32, bias (1, 1) f32
    out_ref,            # (S, 1) f32
    *, heads,
):
    bf16 = jnp.bfloat16
    f32 = jnp.float32

    x = x_ref[...]       # (S, E) bf16
    qx = qx_ref[...]     # (S, E) bf16
    S, E = x.shape

    # Query pre-projection (also the residual stream), f32 accumulation.
    q_ex = jnp.dot(qx, w2t_ref[...], preferred_element_type=f32) + b2_ref[...]
    q_ex_bf = q_ex.astype(bf16)

    # Per-head attention, statically unrolled. Per-head weights are indexed on
    # the leading axis (no lane slicing); out-projection is accumulated.
    attn_acc = jnp.zeros((S, E), f32)
    for h in range(heads):
        q_h = jnp.dot(q_ex_bf, wqh_ref[h], preferred_element_type=f32) + bqh_ref[h]
        k_h = jnp.dot(x, wkh_ref[h], preferred_element_type=f32) + bkh_ref[h]
        v_h = jnp.dot(x, wvh_ref[h], preferred_element_type=f32) + bvh_ref[h]

        s = jnp.einsum("qd,kd->qk", q_h.astype(bf16), k_h.astype(bf16),
                       preferred_element_type=f32)                     # (S, S)
        s = s - jnp.max(s, axis=-1, keepdims=True)
        p = jnp.exp(s)
        p = p * pl.reciprocal(jnp.sum(p, axis=-1, keepdims=True), approx=True)

        ctx_h = jnp.dot(p.astype(bf16), v_h.astype(bf16),
                        preferred_element_type=f32)                    # (S, Dh)
        attn_acc = attn_acc + jnp.dot(ctx_h.astype(bf16), woh_ref[h],
                                      preferred_element_type=f32)      # (S, E)

    attn_out = attn_acc + bo_ref[...]

    # Residual + layer norm 1 (f32).
    h1 = _layernorm(q_ex + attn_out, g1_ref[...], be1_ref[...])

    # FFN (bf16 MXU matmuls, f32 accumulation / elementwise).
    f = jnp.dot(h1.astype(bf16), wf0t_ref[...], preferred_element_type=f32) + bf0_ref[...]
    f = jnp.maximum(f, 0.0)
    f = jnp.dot(f.astype(bf16), wf1t_ref[...], preferred_element_type=f32) + bf1_ref[...]
    h2 = _layernorm(f + h1, g2_ref[...], be2_ref[...])

    # Output head: Linear(E -> 1) as broadcast-multiply + lane reduce, sigmoid.
    z = jnp.sum(h2 * wlo_ref[...], axis=-1, keepdims=True) + blo_ref[...]   # (S, 1)
    out_ref[...] = jax.nn.sigmoid(z)


def hgakt_forward(input_in, input_ex, params, *, seq_len, heads):
    bf16 = jnp.bfloat16
    E = params["q_embed"].shape[1]
    Dh = E // heads

    # torch.where(input < 0, 0, input)
    input_in = jnp.where(input_in < 0, 0, input_in)
    input_ex = jnp.where(input_ex < 0, 0, input_ex)

    # Embedding lookups (XLA glue) + positional embedding; bf16 activations.
    out_in = jnp.take(params["qa_embed"], input_in, axis=0) + params["pos_embed"][None]
    q_emb = jnp.take(params["q_embed"], input_ex, axis=0)
    out_in = out_in.astype(bf16)
    q_emb = q_emb.astype(bf16)

    B, S, _ = out_in.shape

    # --- weight preparation (layout plumbing, runs once in XLA) -------------
    win, binb = params["in_proj_w"], params["in_proj_b"]
    Wq, Wk, Wv = win[:E], win[E:2 * E], win[2 * E:]
    bq, bk, bv = binb[:, :E], binb[:, E:2 * E], binb[:, 2 * E:]
    scale = 1.0 / (Dh ** 0.5)

    def per_head(w_t, b_row):
        # w_t: (E_in, E_out) K-major, b_row: (1, E_out)
        wh = w_t.reshape(E, heads, Dh).transpose(1, 0, 2)     # (H, E, Dh)
        bh = b_row.reshape(heads, 1, Dh)                      # (H, 1, Dh)
        return wh, bh

    w2t = params["w2"].T                                       # query pre-proj (residual)
    wqh, bqh = per_head(Wq.T * scale, bq * scale)              # scale folded in
    wkh, bkh = per_head(params["w1"].T @ Wk.T, params["b1"] @ Wk.T + bk)   # fuse linear[1]
    wvh, bvh = per_head(params["w0"].T @ Wv.T, params["b0"] @ Wv.T + bv)   # fuse linear[0]
    woh = params["out_proj_w"].T.reshape(heads, Dh, E)         # per-head out-proj rows

    weights = [
        w2t.astype(bf16), params["b2"],
        wqh.astype(bf16), bqh,
        wkh.astype(bf16), bkh,
        wvh.astype(bf16), bvh,
        woh.astype(bf16), params["out_proj_b"],
        params["ln1_g"], params["ln1_b"],
        params["wf0"].T.astype(bf16), params["bf0"],
        params["wf1"].T.astype(bf16), params["bf1"],
        params["ln2_g"], params["ln2_b"],
        params["wlo"], params["blo"],
    ]

    def const_spec(shape):
        return pl.BlockSpec(shape, lambda b, _s=shape: (0,) * len(_s))

    data_spec = pl.BlockSpec((None, S, E), lambda b: (b, 0, 0))
    weight_specs = [
        const_spec((E, E)), const_spec((1, E)),
        const_spec((heads, E, Dh)), const_spec((heads, 1, Dh)),
        const_spec((heads, E, Dh)), const_spec((heads, 1, Dh)),
        const_spec((heads, E, Dh)), const_spec((heads, 1, Dh)),
        const_spec((heads, Dh, E)), const_spec((1, E)),
        const_spec((1, E)), const_spec((1, E)),
        const_spec((E, E)), const_spec((1, E)),
        const_spec((E, E)), const_spec((1, E)),
        const_spec((1, E)), const_spec((1, E)),
        const_spec((1, E)), const_spec((1, 1)),
    ]

    out = pl.pallas_call(
        functools.partial(hgakt_kernel, heads=heads),
        out_shape=jax.ShapeDtypeStruct((B, S, 1), jnp.float32),
        grid=(B,),
        in_specs=[data_spec, data_spec] + weight_specs,
        out_specs=pl.BlockSpec((None, S, 1), lambda b: (b, 0, 0)),
        compiler_params=pltpu.CompilerParams(
            dimension_semantics=("parallel",),
        ),
    )(out_in, q_emb, *weights)

    # sigmoid(linear_out(...)).sum(dim=-1)[:, :-1]
    return out[:, :-1, 0]


def make_params(key, q_num, s_num, seq_len):
    E = 2 * s_num
    keys = jax.random.split(key, 16)

    # q-s relation matrix (frozen embedding tables, as in set_qs_matrix)
    qs = (jax.random.uniform(keys[0], (q_num, s_num)) < 0.3).astype(jnp.float32)
    zeros = jnp.zeros_like(qs)
    q_embed = jnp.concatenate([qs, zeros], axis=1)                    # (q_num, E)
    qa_embed = jnp.concatenate(
        [jnp.concatenate([qs, zeros], axis=1),
         jnp.concatenate([zeros, qs], axis=1)], axis=0)               # (2*q_num, E)

    def lin_init(k, out_f, in_f, scale=0.1):
        kw, kb = jax.random.split(k)
        return (scale * jax.random.normal(kw, (out_f, in_f), jnp.float32),
                scale * jax.random.normal(kb, (1, out_f), jnp.float32))

    w0, b0 = lin_init(keys[1], E, E)
    w1, b1 = lin_init(keys[2], E, E)
    w2, b2 = lin_init(keys[3], E, E)
    in_proj_w = 0.1 * jax.random.normal(keys[4], (3 * E, E), jnp.float32)
    in_proj_b = 0.1 * jax.random.normal(keys[5], (1, 3 * E), jnp.float32)
    out_proj_w, out_proj_b = lin_init(keys[6], E, E)
    wf0, bf0 = lin_init(keys[7], E, E)
    wf1, bf1 = lin_init(keys[8], E, E)
    wlo = 0.1 * jax.random.normal(keys[9], (1, E), jnp.float32)
    blo = 0.1 * jax.random.normal(keys[10], (1, 1), jnp.float32)
    pos_embed = jax.random.normal(keys[11], (seq_len, E), jnp.float32)

    return dict(
        q_embed=q_embed, qa_embed=qa_embed, pos_embed=pos_embed,
        w0=w0, b0=b0, w1=w1, b1=b1, w2=w2, b2=b2,
        in_proj_w=in_proj_w, in_proj_b=in_proj_b,
        out_proj_w=out_proj_w, out_proj_b=out_proj_b,
        ln1_g=jnp.ones((1, E), jnp.float32), ln1_b=jnp.zeros((1, E), jnp.float32),
        wf0=wf0, bf0=bf0, wf1=wf1, bf1=bf1,
        ln2_g=jnp.ones((1, E), jnp.float32), ln2_b=jnp.zeros((1, E), jnp.float32),
        wlo=wlo, blo=blo,
    )


def reference_forward(input_in, input_ex, params, *, seq_len, heads):
    """Pure-JAX f32 reference reproducing the PyTorch forward (eval mode)."""
    input_in = jnp.where(input_in < 0, 0, input_in)
    input_ex = jnp.where(input_ex < 0, 0, input_ex)
    out_in = jnp.take(params["qa_embed"], input_in, axis=0) + params["pos_embed"][None]
    q_emb = jnp.take(params["q_embed"], input_ex, axis=0)
    E = out_in.shape[-1]
    Dh = E // heads

    def lin(a, w, b):
        return a @ w.T + b

    v_in = lin(out_in, params["w0"], params["b0"])
    k_in = lin(out_in, params["w1"], params["b1"])
    q_ex = lin(q_emb, params["w2"], params["b2"])

    win, binb = params["in_proj_w"], params["in_proj_b"]
    q = q_ex @ win[:E].T + binb[:, :E]
    k = k_in @ win[E:2 * E].T + binb[:, E:2 * E]
    v = v_in @ win[2 * E:].T + binb[:, 2 * E:]
    q = q * (Dh ** -0.5)

    B, S, _ = q.shape
    qh = q.reshape(B, S, heads, Dh).transpose(0, 2, 1, 3)
    kh = k.reshape(B, S, heads, Dh).transpose(0, 2, 1, 3)
    vh = v.reshape(B, S, heads, Dh).transpose(0, 2, 1, 3)
    p = jax.nn.softmax(jnp.einsum("bhqd,bhkd->bhqk", qh, kh), axis=-1)
    ctx = jnp.einsum("bhqk,bhkd->bhqd", p, vh).transpose(0, 2, 1, 3).reshape(B, S, E)
    attn_out = lin(ctx, params["out_proj_w"], params["out_proj_b"])

    h = _layernorm(q_ex + attn_out, params["ln1_g"], params["ln1_b"])
    f = jax.nn.relu(lin(h, params["wf0"], params["bf0"]))
    f = lin(f, params["wf1"], params["bf1"])
    h2 = _layernorm(f + h, params["ln2_g"], params["ln2_b"])
    z = jax.nn.sigmoid(lin(h2, params["wlo"], params["blo"])).sum(axis=-1)
    return z[:, :-1]


if __name__ == "__main__":
    # small deterministic config (E = 2 * s_num = 32, Dh = 8)
    q_num, s_num, seq_len, heads, batch = 20, 16, 8, 4, 2

    key = jax.random.PRNGKey(0)
    kp, ki, ke = jax.random.split(key, 3)
    params = make_params(kp, q_num, s_num, seq_len)

    input_in = jax.random.randint(ki, (batch, seq_len), 0, 2 * q_num, dtype=jnp.int32)
    input_ex = jax.random.randint(ke, (batch, seq_len), 0, q_num, dtype=jnp.int32)
    # include negative indices to exercise the torch.where clamp
    input_in = input_in.at[0, 0].set(-1)
    input_ex = input_ex.at[1, 0].set(-1)
    input_y = jnp.zeros((batch, seq_len), jnp.float32)  # unused by forward

    out = hgakt_forward(input_in, input_ex, params, seq_len=seq_len, heads=heads)
    out = jax.block_until_ready(out)

    ref = reference_forward(input_in, input_ex, params, seq_len=seq_len, heads=heads)
    assert out.shape == (batch, seq_len - 1)
    # bf16 MXU inputs + approx reciprocal -> loosen tolerance vs. the f32 reference
    assert jnp.allclose(out, ref, rtol=5e-2, atol=5e-2), (out, ref)

    print("KERNEL_OK")
</pallas_src>

<mosaic_0001>
module attributes {stable_mosaic.version = 11 : i64} {
  func.func @hgakt_kernel(%arg0: i32, %arg1: memref<1x8x32xbf16, #tpu.memory_space<vmem>>, %arg2: memref<1x8x32xbf16, #tpu.memory_space<vmem>>, %arg3: memref<32x32xbf16, #tpu.memory_space<vmem>>, %arg4: memref<1x32xf32, #tpu.memory_space<vmem>>, %arg5: memref<4x32x8xbf16, #tpu.memory_space<vmem>>, %arg6: memref<4x1x8xf32, #tpu.memory_space<vmem>>, %arg7: memref<4x32x8xbf16, #tpu.memory_space<vmem>>, %arg8: memref<4x1x8xf32, #tpu.memory_space<vmem>>, %arg9: memref<4x32x8xbf16, #tpu.memory_space<vmem>>, %arg10: memref<4x1x8xf32, #tpu.memory_space<vmem>>, %arg11: memref<4x8x32xbf16, #tpu.memory_space<vmem>>, %arg12: memref<1x32xf32, #tpu.memory_space<vmem>>, %arg13: memref<1x32xf32, #tpu.memory_space<vmem>>, %arg14: memref<1x32xf32, #tpu.memory_space<vmem>>, %arg15: memref<32x32xbf16, #tpu.memory_space<vmem>>, %arg16: memref<1x32xf32, #tpu.memory_space<vmem>>, %arg17: memref<32x32xbf16, #tpu.memory_space<vmem>>, %arg18: memref<1x32xf32, #tpu.memory_space<vmem>>, %arg19: memref<1x32xf32, #tpu.memory_space<vmem>>, %arg20: memref<1x32xf32, #tpu.memory_space<vmem>>, %arg21: memref<1x32xf32, #tpu.memory_space<vmem>>, %arg22: memref<1x1xf32, #tpu.memory_space<vmem>>, %arg23: memref<1x8x1xf32, #tpu.memory_space<vmem>>) attributes {dimension_semantics = [#tpu.dimension_semantics<parallel>], iteration_bounds = array<i64: 2>, scalar_prefetch = 0 : i64, scratch_operands = 0 : i64, tpu.core_type = #tpu.core_type<tc>, window_params = [{transform_indices = @transform_0, window_bounds = array<i64: 1, 8, 32>}, {transform_indices = @transform_1, window_bounds = array<i64: 1, 8, 32>}, {pipeline_mode = #tpu.pipeline_mode<synchronous>, transform_indices = @transform_2, window_bounds = array<i64: 32, 32>}, {pipeline_mode = #tpu.pipeline_mode<synchronous>, transform_indices = @transform_3, window_bounds = array<i64: 1, 32>}, {pipeline_mode = #tpu.pipeline_mode<synchronous>, transform_indices = @transform_4, window_bounds = array<i64: 4, 32, 8>}, {pipeline_mode = #tpu.pipeline_mode<synchronous>, transform_indices = @transform_5, window_bounds = array<i64: 4, 1, 8>}, {pipeline_mode = #tpu.pipeline_mode<synchronous>, transform_indices = @transform_6, window_bounds = array<i64: 4, 32, 8>}, {pipeline_mode = #tpu.pipeline_mode<synchronous>, transform_indices = @transform_7, window_bounds = array<i64: 4, 1, 8>}, {pipeline_mode = #tpu.pipeline_mode<synchronous>, transform_indices = @transform_8, window_bounds = array<i64: 4, 32, 8>}, {pipeline_mode = #tpu.pipeline_mode<synchronous>, transform_indices = @transform_9, window_bounds = array<i64: 4, 1, 8>}, {pipeline_mode = #tpu.pipeline_mode<synchronous>, transform_indices = @transform_10, window_bounds = array<i64: 4, 8, 32>}, {pipeline_mode = #tpu.pipeline_mode<synchronous>, transform_indices = @transform_11, window_bounds = array<i64: 1, 32>}, {pipeline_mode = #tpu.pipeline_mode<synchronous>, transform_indices = @transform_12, window_bounds = array<i64: 1, 32>}, {pipeline_mode = #tpu.pipeline_mode<synchronous>, transform_indices = @transform_13, window_bounds = array<i64: 1, 32>}, {pipeline_mode = #tpu.pipeline_mode<synchronous>, transform_indices = @transform_14, window_bounds = array<i64: 32, 32>}, {pipeline_mode = #tpu.pipeline_mode<synchronous>, transform_indices = @transform_15, window_bounds = array<i64: 1, 32>}, {pipeline_mode = #tpu.pipeline_mode<synchronous>, transform_indices = @transform_16, window_bounds = array<i64: 32, 32>}, {pipeline_mode = #tpu.pipeline_mode<synchronous>, transform_indices = @transform_17, window_bounds = array<i64: 1, 32>}, {pipeline_mode = #tpu.pipeline_mode<synchronous>, transform_indices = @transform_18, window_bounds = array<i64: 1, 32>}, {pipeline_mode = #tpu.pipeline_mode<synchronous>, transform_indices = @transform_19, window_bounds = array<i64: 1, 32>}, {pipeline_mode = #tpu.pipeline_mode<synchronous>, transform_indices = @transform_20, window_bounds = array<i64: 1, 32>}, {pipeline_mode = #tpu.pipeline_mode<synchronous>, transform_indices = @transform_21, window_bounds = array<i64: 1, 1>}, {transform_indices = @transform_22, window_bounds = array<i64: 1, 8, 1>}]} {
    %c0 = arith.constant 0 : index
    %c0_0 = arith.constant 0 : index
    %c0_1 = arith.constant 0 : index
    %0 = vector.load %arg1[%c0, %c0_0, %c0_1] : memref<1x8x32xbf16, #tpu.memory_space<vmem>>, vector<1x8x32xbf16>
    %1 = vector.shape_cast %0 : vector<1x8x32xbf16> to vector<8x32xbf16>
    %c0_2 = arith.constant 0 : index
    %c0_3 = arith.constant 0 : index
    %c0_4 = arith.constant 0 : index
    %2 = vector.load %arg2[%c0_2, %c0_3, %c0_4] : memref<1x8x32xbf16, #tpu.memory_space<vmem>>, vector<1x8x32xbf16>
    %3 = vector.shape_cast %2 : vector<1x8x32xbf16> to vector<8x32xbf16>
    %c0_5 = arith.constant 0 : index
    %c0_6 = arith.constant 0 : index
    %4 = vector.load %arg3[%c0_5, %c0_6] : memref<32x32xbf16, #tpu.memory_space<vmem>>, vector<32x32xbf16>
    %cst = arith.constant dense<0.000000e+00> : vector<8x32xf32>
    %5 = tpu.matmul %3, %4, %cst {dimension_numbers = #tpu.dot_dimension_numbers<[1], [0], [0], [1], [0, 0, 1, 1], [], []>} : vector<8x32xbf16>, vector<32x32xbf16>, vector<8x32xf32> -> vector<8x32xf32>
    %c0_7 = arith.constant 0 : index
    %c0_8 = arith.constant 0 : index
    %6 = vector.load %arg4[%c0_7, %c0_8] : memref<1x32xf32, #tpu.memory_space<vmem>>, vector<1x32xf32>
    %7 = vector.broadcast %6 : vector<1x32xf32> to vector<8x32xf32>
    %8 = arith.addf %5, %7 : vector<8x32xf32>
    %9 = arith.truncf %8 : vector<8x32xf32> to vector<8x32xbf16>
    %cst_9 = arith.constant 0.000000e+00 : f32
    %10 = vector.broadcast %cst_9 : f32 to vector<8x32xf32>
    %c0_10 = arith.constant 0 : index
    %c0_11 = arith.constant 0 : index
    %c0_12 = arith.constant 0 : index
    %11 = vector.load %arg5[%c0_10, %c0_11, %c0_12] : memref<4x32x8xbf16, #tpu.memory_space<vmem>>, vector<1x32x8xbf16>
    %12 = vector.shape_cast %11 : vector<1x32x8xbf16> to vector<32x8xbf16>
    %cst_13 = arith.constant dense<0.000000e+00> : vector<8x8xf32>
    %13 = tpu.matmul %9, %12, %cst_13 {dimension_numbers = #tpu.dot_dimension_numbers<[1], [0], [0], [1], [0, 0, 1, 1], [], []>} : vector<8x32xbf16>, vector<32x8xbf16>, vector<8x8xf32> -> vector<8x8xf32>
    %c0_14 = arith.constant 0 : index
    %c0_15 = arith.constant 0 : index
    %c0_16 = arith.constant 0 : index
    %14 = vector.load %arg6[%c0_14, %c0_15, %c0_16] : memref<4x1x8xf32, #tpu.memory_space<vmem>>, vector<1x1x8xf32>
    %15 = vector.shape_cast %14 : vector<1x1x8xf32> to vector<1x8xf32>
    %16 = vector.broadcast %15 : vector<1x8xf32> to vector<8x8xf32>
    %17 = arith.addf %13, %16 : vector<8x8xf32>
    %c0_17 = arith.constant 0 : index
    %c0_18 = arith.constant 0 : index
    %c0_19 = arith.constant 0 : index
    %18 = vector.load %arg7[%c0_17, %c0_18, %c0_19] : memref<4x32x8xbf16, #tpu.memory_space<vmem>>, vector<1x32x8xbf16>
    %19 = vector.shape_cast %18 : vector<1x32x8xbf16> to vector<32x8xbf16>
    %cst_20 = arith.constant dense<0.000000e+00> : vector<8x8xf32>
    %20 = tpu.matmul %1, %19, %cst_20 {dimension_numbers = #tpu.dot_dimension_numbers<[1], [0], [0], [1], [0, 0, 1, 1], [], []>} : vector<8x32xbf16>, vector<32x8xbf16>, vector<8x8xf32> -> vector<8x8xf32>
    %c0_21 = arith.constant 0 : index
    %c0_22 = arith.constant 0 : index
    %c0_23 = arith.constant 0 : index
    %21 = vector.load %arg8[%c0_21, %c0_22, %c0_23] : memref<4x1x8xf32, #tpu.memory_space<vmem>>, vector<1x1x8xf32>
    %22 = vector.shape_cast %21 : vector<1x1x8xf32> to vector<1x8xf32>
    %23 = vector.broadcast %22 : vector<1x8xf32> to vector<8x8xf32>
    %24 = arith.addf %20, %23 : vector<8x8xf32>
    %c0_24 = arith.constant 0 : index
    %c0_25 = arith.constant 0 : index
    %c0_26 = arith.constant 0 : index
    %25 = vector.load %arg9[%c0_24, %c0_25, %c0_26] : memref<4x32x8xbf16, #tpu.memory_space<vmem>>, vector<1x32x8xbf16>
    %26 = vector.shape_cast %25 : vector<1x32x8xbf16> to vector<32x8xbf16>
    %cst_27 = arith.constant dense<0.000000e+00> : vector<8x8xf32>
    %27 = tpu.matmul %1, %26, %cst_27 {dimension_numbers = #tpu.dot_dimension_numbers<[1], [0], [0], [1], [0, 0, 1, 1], [], []>} : vector<8x32xbf16>, vector<32x8xbf16>, vector<8x8xf32> -> vector<8x8xf32>
    %c0_28 = arith.constant 0 : index
    %c0_29 = arith.constant 0 : index
    %c0_30 = arith.constant 0 : index
    %28 = vector.load %arg10[%c0_28, %c0_29, %c0_30] : memref<4x1x8xf32, #tpu.memory_space<vmem>>, vector<1x1x8xf32>
    %29 = vector.shape_cast %28 : vector<1x1x8xf32> to vector<1x8xf32>
    %30 = vector.broadcast %29 : vector<1x8xf32> to vector<8x8xf32>
    %31 = arith.addf %27, %30 : vector<8x8xf32>
    %32 = arith.truncf %17 : vector<8x8xf32> to vector<8x8xbf16>
    %33 = arith.truncf %24 : vector<8x8xf32> to vector<8x8xbf16>
    "tpu.trace_start"() <{level = 10 : i32, message = "qd,kd->qk"}> : () -> ()
    %cst_31 = arith.constant dense<0.000000e+00> : vector<8x8xf32>
    %34 = tpu.matmul %32, %33, %cst_31 {dimension_numbers = #tpu.dot_dimension_numbers<[1], [1], [0], [0], [0, 0, 1, 0], [], []>} : vector<8x8xbf16>, vector<8x8xbf16>, vector<8x8xf32> -> vector<8x8xf32>
    "tpu.trace_stop"() : () -> ()
    %cst_32 = arith.constant dense<0xFF800000> : vector<8xf32>
    %35 = vector.multi_reduction <maximumf>, %34, %cst_32 [1] : vector<8x8xf32> to vector<8xf32>
    %36 = vector.shape_cast %35 : vector<8xf32> to vector<8x1xf32>
    %37 = vector.broadcast %36 : vector<8x1xf32> to vector<8x8xf32>
    %38 = arith.subf %34, %37 : vector<8x8xf32>
    %39 = math.exp %38 : vector<8x8xf32>
    %cst_33 = arith.constant dense<0.000000e+00> : vector<8xf32>
    %40 = vector.multi_reduction <add>, %39, %cst_33 [1] : vector<8x8xf32> to vector<8xf32>
    %41 = vector.shape_cast %40 : vector<8xf32> to vector<8x1xf32>
    %42 = tpu.reciprocal %41 {approx = true} : vector<8x1xf32> -> vector<8x1xf32>
    %43 = vector.broadcast %42 : vector<8x1xf32> to vector<8x8xf32>
    %44 = arith.mulf %39, %43 : vector<8x8xf32>
    %45 = arith.truncf %44 : vector<8x8xf32> to vector<8x8xbf16>
    %46 = arith.truncf %31 : vector<8x8xf32> to vector<8x8xbf16>
    %cst_34 = arith.constant dense<0.000000e+00> : vector<8x8xf32>
    %47 = tpu.matmul %45, %46, %cst_34 {dimension_numbers = #tpu.dot_dimension_numbers<[1], [0], [0], [1], [0, 0, 1, 1], [], []>} : vector<8x8xbf16>, vector<8x8xbf16>, vector<8x8xf32> -> vector<8x8xf32>
    %48 = arith.truncf %47 : vector<8x8xf32> to vector<8x8xbf16>
    %c0_35 = arith.constant 0 : index
    %c0_36 = arith.constant 0 : index
    %c0_37 = arith.constant 0 : index
    %49 = vector.load %arg11[%c0_35, %c0_36, %c0_37] : memref<4x8x32xbf16, #tpu.memory_space<vmem>>, vector<1x8x32xbf16>
    %50 = vector.shape_cast %49 : vector<1x8x32xbf16> to vector<8x32xbf16>
    %cst_38 = arith.constant dense<0.000000e+00> : vector<8x32xf32>
    %51 = tpu.matmul %48, %50, %cst_38 {dimension_numbers = #tpu.dot_dimension_numbers<[1], [0], [0], [1], [0, 0, 1, 1], [], []>} : vector<8x8xbf16>, vector<8x32xbf16>, vector<8x32xf32> -> vector<8x32xf32>
    %52 = arith.addf %10, %51 : vector<8x32xf32>
    %c1 = arith.constant 1 : index
    %c0_39 = arith.constant 0 : index
    %c0_40 = arith.constant 0 : index
    %53 = vector.load %arg5[%c1, %c0_39, %c0_40] : memref<4x32x8xbf16, #tpu.memory_space<vmem>>, vector<1x32x8xbf16>
    %54 = vector.shape_cast %53 : vector<1x32x8xbf16> to vector<32x8xbf16>
    %cst_41 = arith.constant dense<0.000000e+00> : vector<8x8xf32>
    %55 = tpu.matmul %9, %54, %cst_41 {dimension_numbers = #tpu.dot_dimension_numbers<[1], [0], [0], [1], [0, 0, 1, 1], [], []>} : vector<8x32xbf16>, vector<32x8xbf16>, vector<8x8xf32> -> vector<8x8xf32>
    %c1_42 = arith.constant 1 : index
    %c0_43 = arith.constant 0 : index
    %c0_44 = arith.constant 0 : index
    %56 = vector.load %arg6[%c1_42, %c0_43, %c0_44] : memref<4x1x8xf32, #tpu.memory_space<vmem>>, vector<1x1x8xf32>
    %57 = vector.shape_cast %56 : vector<1x1x8xf32> to vector<1x8xf32>
    %58 = vector.broadcast %57 : vector<1x8xf32> to vector<8x8xf32>
    %59 = arith.addf %55, %58 : vector<8x8xf32>
    %c1_45 = arith.constant 1 : index
    %c0_46 = arith.constant 0 : index
    %c0_47 = arith.constant 0 : index
    %60 = vector.load %arg7[%c1_45, %c0_46, %c0_47] : memref<4x32x8xbf16, #tpu.memory_space<vmem>>, vector<1x32x8xbf16>
    %61 = vector.shape_cast %60 : vector<1x32x8xbf16> to vector<32x8xbf16>
    %cst_48 = arith.constant dense<0.000000e+00> : vector<8x8xf32>
    %62 = tpu.matmul %1, %61, %cst_48 {dimension_numbers = #tpu.dot_dimension_numbers<[1], [0], [0], [1], [0, 0, 1, 1], [], []>} : vector<8x32xbf16>, vector<32x8xbf16>, vector<8x8xf32> -> vector<8x8xf32>
    %c1_49 = arith.constant 1 : index
    %c0_50 = arith.constant 0 : index
    %c0_51 = arith.constant 0 : index
    %63 = vector.load %arg8[%c1_49, %c0_50, %c0_51] : memref<4x1x8xf32, #tpu.memory_space<vmem>>, vector<1x1x8xf32>
    %64 = vector.shape_cast %63 : vector<1x1x8xf32> to vector<1x8xf32>
    %65 = vector.broadcast %64 : vector<1x8xf32> to vector<8x8xf32>
    %66 = arith.addf %62, %65 : vector<8x8xf32>
    %c1_52 = arith.constant 1 : index
    %c0_53 = arith.constant 0 : index
    %c0_54 = arith.constant 0 : index
    %67 = vector.load %arg9[%c1_52, %c0_53, %c0_54] : memref<4x32x8xbf16, #tpu.memory_space<vmem>>, vector<1x32x8xbf16>
    %68 = vector.shape_cast %67 : vector<1x32x8xbf16> to vector<32x8xbf16>
    %cst_55 = arith.constant dense<0.000000e+00> : vector<8x8xf32>
    %69 = tpu.matmul %1, %68, %cst_55 {dimension_numbers = #tpu.dot_dimension_numbers<[1], [0], [0], [1], [0, 0, 1, 1], [], []>} : vector<8x32xbf16>, vector<32x8xbf16>, vector<8x8xf32> -> vector<8x8xf32>
    %c1_56 = arith.constant 1 : index
    %c0_57 = arith.constant 0 : index
    %c0_58 = arith.constant 0 : index
    %70 = vector.load %arg10[%c1_56, %c0_57, %c0_58] : memref<4x1x8xf32, #tpu.memory_space<vmem>>, vector<1x1x8xf32>
    %71 = vector.shape_cast %70 : vector<1x1x8xf32> to vector<1x8xf32>
    %72 = vector.broadcast %71 : vector<1x8xf32> to vector<8x8xf32>
    %73 = arith.addf %69, %72 : vector<8x8xf32>
    %74 = arith.truncf %59 : vector<8x8xf32> to vector<8x8xbf16>
    %75 = arith.truncf %66 : vector<8x8xf32> to vector<8x8xbf16>
    "tpu.trace_start"() <{level = 10 : i32, message = "qd,kd->qk"}> : () -> ()
    %cst_59 = arith.constant dense<0.000000e+00> : vector<8x8xf32>
    %76 = tpu.matmul %74, %75, %cst_59 {dimension_numbers = #tpu.dot_dimension_numbers<[1], [1], [0], [0], [0, 0, 1, 0], [], []>} : vector<8x8xbf16>, vector<8x8xbf16>, vector<8x8xf32> -> vector<8x8xf32>
    "tpu.trace_stop"() : () -> ()
    %cst_60 = arith.constant dense<0xFF800000> : vector<8xf32>
    %77 = vector.multi_reduction <maximumf>, %76, %cst_60 [1] : vector<8x8xf32> to vector<8xf32>
    %78 = vector.shape_cast %77 : vector<8xf32> to vector<8x1xf32>
    %79 = vector.broadcast %78 : vector<8x1xf32> to vector<8x8xf32>
    %80 = arith.subf %76, %79 : vector<8x8xf32>
    %81 = math.exp %80 : vector<8x8xf32>
    %cst_61 = arith.constant dense<0.000000e+00> : vector<8xf32>
    %82 = vector.multi_reduction <add>, %81, %cst_61 [1] : vector<8x8xf32> to vector<8xf32>
    %83 = vector.shape_cast %82 : vector<8xf32> to vector<8x1xf32>
    %84 = tpu.reciprocal %83 {approx = true} : vector<8x1xf32> -> vector<8x1xf32>
    %85 = vector.broadcast %84 : vector<8x1xf32> to vector<8x8xf32>
    %86 = arith.mulf %81, %85 : vector<8x8xf32>
    %87 = arith.truncf %86 : vector<8x8xf32> to vector<8x8xbf16>
    %88 = arith.truncf %73 : vector<8x8xf32> to vector<8x8xbf16>
    %cst_62 = arith.constant dense<0.000000e+00> : vector<8x8xf32>
    %89 = tpu.matmul %87, %88, %cst_62 {dimension_numbers = #tpu.dot_dimension_numbers<[1], [0], [0], [1], [0, 0, 1, 1], [], []>} : vector<8x8xbf16>, vector<8x8xbf16>, vector<8x8xf32> -> vector<8x8xf32>
    %90 = arith.truncf %89 : vector<8x8xf32> to vector<8x8xbf16>
    %c1_63 = arith.constant 1 : index
    %c0_64 = arith.constant 0 : index
    %c0_65 = arith.constant 0 : index
    %91 = vector.load %arg11[%c1_63, %c0_64, %c0_65] : memref<4x8x32xbf16, #tpu.memory_space<vmem>>, vector<1x8x32xbf16>
    %92 = vector.shape_cast %91 : vector<1x8x32xbf16> to vector<8x32xbf16>
    %cst_66 = arith.constant dense<0.000000e+00> : vector<8x32xf32>
    %93 = tpu.matmul %90, %92, %cst_66 {dimension_numbers = #tpu.dot_dimension_numbers<[1], [0], [0], [1], [0, 0, 1, 1], [], []>} : vector<8x8xbf16>, vector<8x32xbf16>, vector<8x32xf32> -> vector<8x32xf32>
    %94 = arith.addf %52, %93 : vector<8x32xf32>
    %c2 = arith.constant 2 : index
    %c0_67 = arith.constant 0 : index
    %c0_68 = arith.constant 0 : index
    %95 = vector.load %arg5[%c2, %c0_67, %c0_68] : memref<4x32x8xbf16, #tpu.memory_space<vmem>>, vector<1x32x8xbf16>
    %96 = vector.shape_cast %95 : vector<1x32x8xbf16> to vector<32x8xbf16>
    %cst_69 = arith.constant dense<0.000000e+00> : vector<8x8xf32>
    %97 = tpu.matmul %9, %96, %cst_69 {dimension_numbers = #tpu.dot_dimension_numbers<[1], [0], [0], [1], [0, 0, 1, 1], [], []>} : vector<8x32xbf16>, vector<32x8xbf16>, vector<8x8xf32> -> vector<8x8xf32>
    %c2_70 = arith.constant 2 : index
    %c0_71 = arith.constant 0 : index
    %c0_72 = arith.constant 0 : index
    %98 = vector.load %arg6[%c2_70, %c0_71, %c0_72] : memref<4x1x8xf32, #tpu.memory_space<vmem>>, vector<1x1x8xf32>
    %99 = vector.shape_cast %98 : vector<1x1x8xf32> to vector<1x8xf32>
    %100 = vector.broadcast %99 : vector<1x8xf32> to vector<8x8xf32>
    %101 = arith.addf %97, %100 : vector<8x8xf32>
    %c2_73 = arith.constant 2 : index
    %c0_74 = arith.constant 0 : index
    %c0_75 = arith.constant 0 : index
    %102 = vector.load %arg7[%c2_73, %c0_74, %c0_75] : memref<4x32x8xbf16, #tpu.memory_space<vmem>>, vector<1x32x8xbf16>
    %103 = vector.shape_cast %102 : vector<1x32x8xbf16> to vector<32x8xbf16>
    %cst_76 = arith.constant dense<0.000000e+00> : vector<8x8xf32>
    %104 = tpu.matmul %1, %103, %cst_76 {dimension_numbers = #tpu.dot_dimension_numbers<[1], [0], [0], [1], [0, 0, 1, 1], [], []>} : vector<8x32xbf16>, vector<32x8xbf16>, vector<8x8xf32> -> vector<8x8xf32>
    %c2_77 = arith.constant 2 : index
    %c0_78 = arith.constant 0 : index
    %c0_79 = arith.constant 0 : index
    %105 = vector.load %arg8[%c2_77, %c0_78, %c0_79] : memref<4x1x8xf32, #tpu.memory_space<vmem>>, vector<1x1x8xf32>
    %106 = vector.shape_cast %105 : vector<1x1x8xf32> to vector<1x8xf32>
    %107 = vector.broadcast %106 : vector<1x8xf32> to vector<8x8xf32>
    %108 = arith.addf %104, %107 : vector<8x8xf32>
    %c2_80 = arith.constant 2 : index
    %c0_81 = arith.constant 0 : index
    %c0_82 = arith.constant 0 : index
    %109 = vector.load %arg9[%c2_80, %c0_81, %c0_82] : memref<4x32x8xbf16, #tpu.memory_space<vmem>>, vector<1x32x8xbf16>
    %110 = vector.shape_cast %109 : vector<1x32x8xbf16> to vector<32x8xbf16>
    %cst_83 = arith.constant dense<0.000000e+00> : vector<8x8xf32>
    %111 = tpu.matmul %1, %110, %cst_83 {dimension_numbers = #tpu.dot_dimension_numbers<[1], [0], [0], [1], [0, 0, 1, 1], [], []>} : vector<8x32xbf16>, vector<32x8xbf16>, vector<8x8xf32> -> vector<8x8xf32>
    %c2_84 = arith.constant 2 : index
    %c0_85 = arith.constant 0 : index
    %c0_86 = arith.constant 0 : index
    %112 = vector.load %arg10[%c2_84, %c0_85, %c0_86] : memref<4x1x8xf32, #tpu.memory_space<vmem>>, vector<1x1x8xf32>
    %113 = vector.shape_cast %112 : vector<1x1x8xf32> to vector<1x8xf32>
    %114 = vector.broadcast %113 : vector<1x8xf32> to vector<8x8xf32>
    %115 = arith.addf %111, %114 : vector<8x8xf32>
    %116 = arith.truncf %101 : vector<8x8xf32> to vector<8x8xbf16>
    %117 = arith.truncf %108 : vector<8x8xf32> to vector<8x8xbf16>
    "tpu.trace_start"() <{level = 10 : i32, message = "qd,kd->qk"}> : () -> ()
    %cst_87 = arith.constant dense<0.000000e+00> : vector<8x8xf32>
    %118 = tpu.matmul %116, %117, %cst_87 {dimension_numbers = #tpu.dot_dimension_numbers<[1], [1], [0], [0], [0, 0, 1, 0], [], []>} : vector<8x8xbf16>, vector<8x8xbf16>, vector<8x8xf32> -> vector<8x8xf32>
    "tpu.trace_stop"() : () -> ()
    %cst_88 = arith.constant dense<0xFF800000> : vector<8xf32>
    %119 = vector.multi_reduction <maximumf>, %118, %cst_88 [1] : vector<8x8xf32> to vector<8xf32>
    %120 = vector.shape_cast %119 : vector<8xf32> to vector<8x1xf32>
    %121 = vector.broadcast %120 : vector<8x1xf32> to vector<8x8xf32>
    %122 = arith.subf %118, %121 : vector<8x8xf32>
    %123 = math.exp %122 : vector<8x8xf32>
    %cst_89 = arith.constant dense<0.000000e+00> : vector<8xf32>
    %124 = vector.multi_reduction <add>, %123, %cst_89 [1] : vector<8x8xf32> to vector<8xf32>
    %125 = vector.shape_cast %124 : vector<8xf32> to vector<8x1xf32>
    %126 = tpu.reciprocal %125 {approx = true} : vector<8x1xf32> -> vector<8x1xf32>
    %127 = vector.broadcast %126 : vector<8x1xf32> to vector<8x8xf32>
    %128 = arith.mulf %123, %127 : vector<8x8xf32>
    %129 = arith.truncf %128 : vector<8x8xf32> to vector<8x8xbf16>
    %130 = arith.truncf %115 : vector<8x8xf32> to vector<8x8xbf16>
    %cst_90 = arith.constant dense<0.000000e+00> : vector<8x8xf32>
    %131 = tpu.matmul %129, %130, %cst_90 {dimension_numbers = #tpu.dot_dimension_numbers<[1], [0], [0], [1], [0, 0, 1, 1], [], []>} : vector<8x8xbf16>, vector<8x8xbf16>, vector<8x8xf32> -> vector<8x8xf32>
    %132 = arith.truncf %131 : vector<8x8xf32> to vector<8x8xbf16>
    %c2_91 = arith.constant 2 : index
    %c0_92 = arith.constant 0 : index
    %c0_93 = arith.constant 0 : index
    %133 = vector.load %arg11[%c2_91, %c0_92, %c0_93] : memref<4x8x32xbf16, #tpu.memory_space<vmem>>, vector<1x8x32xbf16>
    %134 = vector.shape_cast %133 : vector<1x8x32xbf16> to vector<8x32xbf16>
    %cst_94 = arith.constant dense<0.000000e+00> : vector<8x32xf32>
    %135 = tpu.matmul %132, %134, %cst_94 {dimension_numbers = #tpu.dot_dimension_numbers<[1], [0], [0], [1], [0, 0, 1, 1], [], []>} : vector<8x8xbf16>, vector<8x32xbf16>, vector<8x32xf32> -> vector<8x32xf32>
    %136 = arith.addf %94, %135 : vector<8x32xf32>
    %c3 = arith.constant 3 : index
    %c0_95 = arith.constant 0 : index
    %c0_96 = arith.constant 0 : index
    %137 = vector.load %arg5[%c3, %c0_95, %c0_96] : memref<4x32x8xbf16, #tpu.memory_space<vmem>>, vector<1x32x8xbf16>
    %138 = vector.shape_cast %137 : vector<1x32x8xbf16> to vector<32x8xbf16>
    %cst_97 = arith.constant dense<0.000000e+00> : vector<8x8xf32>
    %139 = tpu.matmul %9, %138, %cst_97 {dimension_numbers = #tpu.dot_dimension_numbers<[1], [0], [0], [1], [0, 0, 1, 1], [], []>} : vector<8x32xbf16>, vector<32x8xbf16>, vector<8x8xf32> -> vector<8x8xf32>
    %c3_98 = arith.constant 3 : index
    %c0_99 = arith.constant 0 : index
    %c0_100 = arith.constant 0 : index
    %140 = vector.load %arg6[%c3_98, %c0_99, %c0_100] : memref<4x1x8xf32, #tpu.memory_space<vmem>>, vector<1x1x8xf32>
    %141 = vector.shape_cast %140 : vector<1x1x8xf32> to vector<1x8xf32>
    %142 = vector.broadcast %141 : vector<1x8xf32> to vector<8x8xf32>
    %143 = arith.addf %139, %142 : vector<8x8xf32>
    %c3_101 = arith.constant 3 : index
    %c0_102 = arith.constant 0 : index
    %c0_103 = arith.constant 0 : index
    %144 = vector.load %arg7[%c3_101, %c0_102, %c0_103] : memref<4x32x8xbf16, #tpu.memory_space<vmem>>, vector<1x32x8xbf16>
    %145 = vector.shape_cast %144 : vector<1x32x8xbf16> to vector<32x8xbf16>
    %cst_104 = arith.constant dense<0.000000e+00> : vector<8x8xf32>
    %146 = tpu.matmul %1, %145, %cst_104 {dimension_numbers = #tpu.dot_dimension_numbers<[1], [0], [0], [1], [0, 0, 1, 1], [], []>} : vector<8x32xbf16>, vector<32x8xbf16>, vector<8x8xf32> -> vector<8x8xf32>
    %c3_105 = arith.constant 3 : index
    %c0_106 = arith.constant 0 : index
    %c0_107 = arith.constant 0 : index
    %147 = vector.load %arg8[%c3_105, %c0_106, %c0_107] : memref<4x1x8xf32, #tpu.memory_space<vmem>>, vector<1x1x8xf32>
    %148 = vector.shape_cast %147 : vector<1x1x8xf32> to vector<1x8xf32>
    %149 = vector.broadcast %148 : vector<1x8xf32> to vector<8x8xf32>
    %150 = arith.addf %146, %149 : vector<8x8xf32>
    %c3_108 = arith.constant 3 : index
    %c0_109 = arith.constant 0 : index
    %c0_110 = arith.constant 0 : index
    %151 = vector.load %arg9[%c3_108, %c0_109, %c0_110] : memref<4x32x8xbf16, #tpu.memory_space<vmem>>, vector<1x32x8xbf16>
    %152 = vector.shape_cast %151 : vector<1x32x8xbf16> to vector<32x8xbf16>
    %cst_111 = arith.constant dense<0.000000e+00> : vector<8x8xf32>
    %153 = tpu.matmul %1, %152, %cst_111 {dimension_numbers = #tpu.dot_dimension_numbers<[1], [0], [0], [1], [0, 0, 1, 1], [], []>} : vector<8x32xbf16>, vector<32x8xbf16>, vector<8x8xf32> -> vector<8x8xf32>
    %c3_112 = arith.constant 3 : index
    %c0_113 = arith.constant 0 : index
    %c0_114 = arith.constant 0 : index
    %154 = vector.load %arg10[%c3_112, %c0_113, %c0_114] : memref<4x1x8xf32, #tpu.memory_space<vmem>>, vector<1x1x8xf32>
    %155 = vector.shape_cast %154 : vector<1x1x8xf32> to vector<1x8xf32>
    %156 = vector.broadcast %155 : vector<1x8xf32> to vector<8x8xf32>
    %157 = arith.addf %153, %156 : vector<8x8xf32>
    %158 = arith.truncf %143 : vector<8x8xf32> to vector<8x8xbf16>
    %159 = arith.truncf %150 : vector<8x8xf32> to vector<8x8xbf16>
    "tpu.trace_start"() <{level = 10 : i32, message = "qd,kd->qk"}> : () -> ()
    %cst_115 = arith.constant dense<0.000000e+00> : vector<8x8xf32>
    %160 = tpu.matmul %158, %159, %cst_115 {dimension_numbers = #tpu.dot_dimension_numbers<[1], [1], [0], [0], [0, 0, 1, 0], [], []>} : vector<8x8xbf16>, vector<8x8xbf16>, vector<8x8xf32> -> vector<8x8xf32>
    "tpu.trace_stop"() : () -> ()
    %cst_116 = arith.constant dense<0xFF800000> : vector<8xf32>
    %161 = vector.multi_reduction <maximumf>, %160, %cst_116 [1] : vector<8x8xf32> to vector<8xf32>
    %162 = vector.shape_cast %161 : vector<8xf32> to vector<8x1xf32>
    %163 = vector.broadcast %162 : vector<8x1xf32> to vector<8x8xf32>
    %164 = arith.subf %160, %163 : vector<8x8xf32>
    %165 = math.exp %164 : vector<8x8xf32>
    %cst_117 = arith.constant dense<0.000000e+00> : vector<8xf32>
    %166 = vector.multi_reduction <add>, %165, %cst_117 [1] : vector<8x8xf32> to vector<8xf32>
    %167 = vector.shape_cast %166 : vector<8xf32> to vector<8x1xf32>
    %168 = tpu.reciprocal %167 {approx = true} : vector<8x1xf32> -> vector<8x1xf32>
    %169 = vector.broadcast %168 : vector<8x1xf32> to vector<8x8xf32>
    %170 = arith.mulf %165, %169 : vector<8x8xf32>
    %171 = arith.truncf %170 : vector<8x8xf32> to vector<8x8xbf16>
    %172 = arith.truncf %157 : vector<8x8xf32> to vector<8x8xbf16>
    %cst_118 = arith.constant dense<0.000000e+00> : vector<8x8xf32>
    %173 = tpu.matmul %171, %172, %cst_118 {dimension_numbers = #tpu.dot_dimension_numbers<[1], [0], [0], [1], [0, 0, 1, 1], [], []>} : vector<8x8xbf16>, vector<8x8xbf16>, vector<8x8xf32> -> vector<8x8xf32>
    %174 = arith.truncf %173 : vector<8x8xf32> to vector<8x8xbf16>
    %c3_119 = arith.constant 3 : index
    %c0_120 = arith.constant 0 : index
    %c0_121 = arith.constant 0 : index
    %175 = vector.load %arg11[%c3_119, %c0_120, %c0_121] : memref<4x8x32xbf16, #tpu.memory_space<vmem>>, vector<1x8x32xbf16>
    %176 = vector.shape_cast %175 : vector<1x8x32xbf16> to vector<8x32xbf16>
    %cst_122 = arith.constant dense<0.000000e+00> : vector<8x32xf32>
    %177 = tpu.matmul %174, %176, %cst_122 {dimension_numbers = #tpu.dot_dimension_numbers<[1], [0], [0], [1], [0, 0, 1, 1], [], []>} : vector<8x8xbf16>, vector<8x32xbf16>, vector<8x32xf32> -> vector<8x32xf32>
    %178 = arith.addf %136, %177 : vector<8x32xf32>
    %c0_123 = arith.constant 0 : index
    %c0_124 = arith.constant 0 : index
    %179 = vector.load %arg12[%c0_123, %c0_124] : memref<1x32xf32, #tpu.memory_space<vmem>>, vector<1x32xf32>
    %180 = vector.broadcast %179 : vector<1x32xf32> to vector<8x32xf32>
    %181 = arith.addf %178, %180 : vector<8x32xf32>
    %182 = arith.addf %8, %181 : vector<8x32xf32>
    %c0_125 = arith.constant 0 : index
    %c0_126 = arith.constant 0 : index
    %183 = vector.load %arg13[%c0_125, %c0_126] : memref<1x32xf32, #tpu.memory_space<vmem>>, vector<1x32xf32>
    %c0_127 = arith.constant 0 : index
    %c0_128 = arith.constant 0 : index
    %184 = vector.load %arg14[%c0_127, %c0_128] : memref<1x32xf32, #tpu.memory_space<vmem>>, vector<1x32xf32>
    %cst_129 = arith.constant dense<0.000000e+00> : vector<8xf32>
    %185 = vector.multi_reduction <add>, %182, %cst_129 [1] : vector<8x32xf32> to vector<8xf32>
    %186 = vector.shape_cast %185 : vector<8xf32> to vector<8x1xf32>
    %cst_130 = arith.constant 3.200000e+01 : f32
    %187 = vector.broadcast %cst_130 : f32 to vector<8x1xf32>
    %188 = arith.divf %186, %187 : vector<8x1xf32>
    %189 = vector.broadcast %188 : vector<8x1xf32> to vector<8x32xf32>
    %190 = arith.subf %182, %189 : vector<8x32xf32>
    %191 = arith.mulf %190, %190 : vector<8x32xf32>
    %cst_131 = arith.constant dense<0.000000e+00> : vector<8xf32>
    %192 = vector.multi_reduction <add>, %191, %cst_131 [1] : vector<8x32xf32> to vector<8xf32>
    %193 = vector.shape_cast %192 : vector<8xf32> to vector<8x1xf32>
    %cst_132 = arith.constant 3.200000e+01 : f32
    %194 = vector.broadcast %cst_132 : f32 to vector<8x1xf32>
    %195 = arith.divf %193, %194 : vector<8x1xf32>
    %196 = vector.broadcast %188 : vector<8x1xf32> to vector<8x32xf32>
    %197 = arith.subf %182, %196 : vector<8x32xf32>
    %cst_133 = arith.constant 9.99999974E-6 : f32
    %198 = vector.broadcast %cst_133 : f32 to vector<8x1xf32>
    %199 = arith.addf %195, %198 : vector<8x1xf32>
    %200 = math.rsqrt %199 : vector<8x1xf32>
    %201 = vector.broadcast %200 : vector<8x1xf32> to vector<8x32xf32>
    %202 = arith.mulf %197, %201 : vector<8x32xf32>
    %203 = vector.broadcast %183 : vector<1x32xf32> to vector<8x32xf32>
    %204 = arith.mulf %202, %203 : vector<8x32xf32>
    %205 = vector.broadcast %184 : vector<1x32xf32> to vector<8x32xf32>
    %206 = arith.addf %204, %205 : vector<8x32xf32>
    %207 = arith.truncf %206 : vector<8x32xf32> to vector<8x32xbf16>
    %c0_134 = arith.constant 0 : index
    %c0_135 = arith.constant 0 : index
    %208 = vector.load %arg15[%c0_134, %c0_135] : memref<32x32xbf16, #tpu.memory_space<vmem>>, vector<32x32xbf16>
    %cst_136 = arith.constant dense<0.000000e+00> : vector<8x32xf32>
    %209 = tpu.matmul %207, %208, %cst_136 {dimension_numbers = #tpu.dot_dimension_numbers<[1], [0], [0], [1], [0, 0, 1, 1], [], []>} : vector<8x32xbf16>, vector<32x32xbf16>, vector<8x32xf32> -> vector<8x32xf32>
    %c0_137 = arith.constant 0 : index
    %c0_138 = arith.constant 0 : index
    %210 = vector.load %arg16[%c0_137, %c0_138] : memref<1x32xf32, #tpu.memory_space<vmem>>, vector<1x32xf32>
    %211 = vector.broadcast %210 : vector<1x32xf32> to vector<8x32xf32>
    %212 = arith.addf %209, %211 : vector<8x32xf32>
    %cst_139 = arith.constant 0.000000e+00 : f32
    %213 = vector.broadcast %cst_139 : f32 to vector<8x32xf32>
    %214 = arith.maximumf %212, %213 : vector<8x32xf32>
    %215 = arith.truncf %214 : vector<8x32xf32> to vector<8x32xbf16>
    %c0_140 = arith.constant 0 : index
    %c0_141 = arith.constant 0 : index
    %216 = vector.load %arg17[%c0_140, %c0_141] : memref<32x32xbf16, #tpu.memory_space<vmem>>, vector<32x32xbf16>
    %cst_142 = arith.constant dense<0.000000e+00> : vector<8x32xf32>
    %217 = tpu.matmul %215, %216, %cst_142 {dimension_numbers = #tpu.dot_dimension_numbers<[1], [0], [0], [1], [0, 0, 1, 1], [], []>} : vector<8x32xbf16>, vector<32x32xbf16>, vector<8x32xf32> -> vector<8x32xf32>
    %c0_143 = arith.constant 0 : index
    %c0_144 = arith.constant 0 : index
    %218 = vector.load %arg18[%c0_143, %c0_144] : memref<1x32xf32, #tpu.memory_space<vmem>>, vector<1x32xf32>
    %219 = vector.broadcast %218 : vector<1x32xf32> to vector<8x32xf32>
    %220 = arith.addf %217, %219 : vector<8x32xf32>
    %221 = arith.addf %220, %206 : vector<8x32xf32>
    %c0_145 = arith.constant 0 : index
    %c0_146 = arith.constant 0 : index
    %222 = vector.load %arg19[%c0_145, %c0_146] : memref<1x32xf32, #tpu.memory_space<vmem>>, vector<1x32xf32>
    %c0_147 = arith.constant 0 : index
    %c0_148 = arith.constant 0 : index
    %223 = vector.load %arg20[%c0_147, %c0_148] : memref<1x32xf32, #tpu.memory_space<vmem>>, vector<1x32xf32>
    %cst_149 = arith.constant dense<0.000000e+00> : vector<8xf32>
    %224 = vector.multi_reduction <add>, %221, %cst_149 [1] : vector<8x32xf32> to vector<8xf32>
    %225 = vector.shape_cast %224 : vector<8xf32> to vector<8x1xf32>
    %cst_150 = arith.constant 3.200000e+01 : f32
    %226 = vector.broadcast %cst_150 : f32 to vector<8x1xf32>
    %227 = arith.divf %225, %226 : vector<8x1xf32>
    %228 = vector.broadcast %227 : vector<8x1xf32> to vector<8x32xf32>
    %229 = arith.subf %221, %228 : vector<8x32xf32>
    %230 = arith.mulf %229, %229 : vector<8x32xf32>
    %cst_151 = arith.constant dense<0.000000e+00> : vector<8xf32>
    %231 = vector.multi_reduction <add>, %230, %cst_151 [1] : vector<8x32xf32> to vector<8xf32>
    %232 = vector.shape_cast %231 : vector<8xf32> to vector<8x1xf32>
    %cst_152 = arith.constant 3.200000e+01 : f32
    %233 = vector.broadcast %cst_152 : f32 to vector<8x1xf32>
    %234 = arith.divf %232, %233 : vector<8x1xf32>
    %235 = vector.broadcast %227 : vector<8x1xf32> to vector<8x32xf32>
    %236 = arith.subf %221, %235 : vector<8x32xf32>
    %cst_153 = arith.constant 9.99999974E-6 : f32
    %237 = vector.broadcast %cst_153 : f32 to vector<8x1xf32>
    %238 = arith.addf %234, %237 : vector<8x1xf32>
    %239 = math.rsqrt %238 : vector<8x1xf32>
    %240 = vector.broadcast %239 : vector<8x1xf32> to vector<8x32xf32>
    %241 = arith.mulf %236, %240 : vector<8x32xf32>
    %242 = vector.broadcast %222 : vector<1x32xf32> to vector<8x32xf32>
    %243 = arith.mulf %241, %242 : vector<8x32xf32>
    %244 = vector.broadcast %223 : vector<1x32xf32> to vector<8x32xf32>
    %245 = arith.addf %243, %244 : vector<8x32xf32>
    %c0_154 = arith.constant 0 : index
    %c0_155 = arith.constant 0 : index
    %246 = vector.load %arg21[%c0_154, %c0_155] : memref<1x32xf32, #tpu.memory_space<vmem>>, vector<1x32xf32>
    %247 = vector.broadcast %246 : vector<1x32xf32> to vector<8x32xf32>
    %248 = arith.mulf %245, %247 : vector<8x32xf32>
    %cst_156 = arith.constant dense<0.000000e+00> : vector<8xf32>
    %249 = vector.multi_reduction <add>, %248, %cst_156 [1] : vector<8x32xf32> to vector<8xf32>
    %250 = vector.shape_cast %249 : vector<8xf32> to vector<8x1xf32>
    %c0_157 = arith.constant 0 : index
    %c0_158 = arith.constant 0 : index
    %251 = vector.load %arg22[%c0_157, %c0_158] : memref<1x1xf32, #tpu.memory_space<vmem>>, vector<1x1xf32>
    %252 = vector.broadcast %251 : vector<1x1xf32> to vector<8x1xf32>
    %253 = arith.addf %250, %252 : vector<8x1xf32>
    %254 = arith.negf %253 : vector<8x1xf32>
    %255 = math.exp %254 : vector<8x1xf32>
    %cst_159 = arith.constant 1.000000e+00 : f32
    %256 = vector.broadcast %cst_159 : f32 to vector<8x1xf32>
    %257 = arith.addf %256, %255 : vector<8x1xf32>
    %258 = arith.divf %256, %257 : vector<8x1xf32>
    %c0_160 = arith.constant 0 : index
    %c0_161 = arith.constant 0 : index
    %c0_162 = arith.constant 0 : index
    %259 = vector.load %arg23[%c0_160, %c0_161, %c0_162] : memref<1x8x1xf32, #tpu.memory_space<vmem>>, vector<1x8x1xf32>
    %260 = vector.shape_cast %259 : vector<1x8x1xf32> to vector<8x1xf32>
    %261 = vector.shape_cast %258 : vector<8x1xf32> to vector<1x8x1xf32>
    tpu.vector_store %arg23[%c0_160, %c0_161, %c0_162], %261 {strides = array<i32>} : memref<1x8x1xf32, #tpu.memory_space<vmem>>, vector<1x8x1xf32>,
    return
  }
  func.func @transform_0(%arg0: i32) -> (i32, i32, i32) {
    %c0_i32 = arith.constant 0 : i32
    %c0_i32_0 = arith.constant 0 : i32
    %c0_i32_1 = arith.constant 0 : i32
    return %arg0, %c0_i32, %c0_i32_0 : i32, i32, i32
  }
  func.func @transform_1(%arg0: i32) -> (i32, i32, i32) {
    %c0_i32 = arith.constant 0 : i32
    %c0_i32_0 = arith.constant 0 : i32
    %c0_i32_1 = arith.constant 0 : i32
    return %arg0, %c0_i32, %c0_i32_0 : i32, i32, i32
  }
  func.func @transform_2(%arg0: i32) -> (i32, i32) {
    %c0_i32 = arith.constant 0 : i32
    %c0_i32_0 = arith.constant 0 : i32
    %c0_i32_1 = arith.constant 0 : i32
    return %c0_i32, %c0_i32_0 : i32, i32
  }
  func.func @transform_3(%arg0: i32) -> (i32, i32) {
    %c0_i32 = arith.constant 0 : i32
    %c0_i32_0 = arith.constant 0 : i32
    %c0_i32_1 = arith.constant 0 : i32
    return %c0_i32, %c0_i32_0 : i32, i32
  }
  func.func @transform_4(%arg0: i32) -> (i32, i32, i32) {
    %c0_i32 = arith.constant 0 : i32
    %c0_i32_0 = arith.constant 0 : i32
    %c0_i32_1 = arith.constant 0 : i32
    %c0_i32_2 = arith.constant 0 : i32
    return %c0_i32, %c0_i32_0, %c0_i32_1 : i32, i32, i32
  }
  func.func @transform_5(%arg0: i32) -> (i32, i32, i32) {
    %c0_i32 = arith.constant 0 : i32
    %c0_i32_0 = arith.constant 0 : i32
    %c0_i32_1 = arith.constant 0 : i32
    %c0_i32_2 = arith.constant 0 : i32
    return %c0_i32, %c0_i32_0, %c0_i32_1 : i32, i32, i32
  }
  func.func @transform_6(%arg0: i32) -> (i32, i32, i32) {
    %c0_i32 = arith.constant 0 : i32
    %c0_i32_0 = arith.constant 0 : i32
    %c0_i32_1 = arith.constant 0 : i32
    %c0_i32_2 = arith.constant 0 : i32
    return %c0_i32, %c0_i32_0, %c0_i32_1 : i32, i32, i32
  }
  func.func @transform_7(%arg0: i32) -> (i32, i32, i32) {
    %c0_i32 = arith.constant 0 : i32
    %c0_i32_0 = arith.constant 0 : i32
    %c0_i32_1 = arith.constant 0 : i32
    %c0_i32_2 = arith.constant 0 : i32
    return %c0_i32, %c0_i32_0, %c0_i32_1 : i32, i32, i32
  }
  func.func @transform_8(%arg0: i32) -> (i32, i32, i32) {
    %c0_i32 = arith.constant 0 : i32
    %c0_i32_0 = arith.constant 0 : i32
    %c0_i32_1 = arith.constant 0 : i32
    %c0_i32_2 = arith.constant 0 : i32
    return %c0_i32, %c0_i32_0, %c0_i32_1 : i32, i32, i32
  }
  func.func @transform_9(%arg0: i32) -> (i32, i32, i32) {
    %c0_i32 = arith.constant 0 : i32
    %c0_i32_0 = arith.constant 0 : i32
    %c0_i32_1 = arith.constant 0 : i32
    %c0_i32_2 = arith.constant 0 : i32
    return %c0_i32, %c0_i32_0, %c0_i32_1 : i32, i32, i32
  }
  func.func @transform_10(%arg0: i32) -> (i32, i32, i32) {
    %c0_i32 = arith.constant 0 : i32
    %c0_i32_0 = arith.constant 0 : i32
    %c0_i32_1 = arith.constant 0 : i32
    %c0_i32_2 = arith.constant 0 : i32
    return %c0_i32, %c0_i32_0, %c0_i32_1 : i32, i32, i32
  }
  func.func @transform_11(%arg0: i32) -> (i32, i32) {
    %c0_i32 = arith.constant 0 : i32
    %c0_i32_0 = arith.constant 0 : i32
    %c0_i32_1 = arith.constant 0 : i32
    return %c0_i32, %c0_i32_0 : i32, i32
  }
  func.func @transform_12(%arg0: i32) -> (i32, i32) {
    %c0_i32 = arith.constant 0 : i32
    %c0_i32_0 = arith.constant 0 : i32
    %c0_i32_1 = arith.constant 0 : i32
    return %c0_i32, %c0_i32_0 : i32, i32
  }
  func.func @transform_13(%arg0: i32) -> (i32, i32) {
    %c0_i32 = arith.constant 0 : i32
    %c0_i32_0 = arith.constant 0 : i32
    %c0_i32_1 = arith.constant 0 : i32
    return %c0_i32, %c0_i32_0 : i32, i32
  }
  func.func @transform_14(%arg0: i32) -> (i32, i32) {
    %c0_i32 = arith.constant 0 : i32
    %c0_i32_0 = arith.constant 0 : i32
    %c0_i32_1 = arith.constant 0 : i32
    return %c0_i32, %c0_i32_0 : i32, i32
  }
  func.func @transform_15(%arg0: i32) -> (i32, i32) {
    %c0_i32 = arith.constant 0 : i32
    %c0_i32_0 = arith.constant 0 : i32
    %c0_i32_1 = arith.constant 0 : i32
    return %c0_i32, %c0_i32_0 : i32, i32
  }
  func.func @transform_16(%arg0: i32) -> (i32, i32) {
    %c0_i32 = arith.constant 0 : i32
    %c0_i32_0 = arith.constant 0 : i32
    %c0_i32_1 = arith.constant 0 : i32
    return %c0_i32, %c0_i32_0 : i32, i32
  }
  func.func @transform_17(%arg0: i32) -> (i32, i32) {
    %c0_i32 = arith.constant 0 : i32
    %c0_i32_0 = arith.constant 0 : i32
    %c0_i32_1 = arith.constant 0 : i32
    return %c0_i32, %c0_i32_0 : i32, i32
  }
  func.func @transform_18(%arg0: i32) -> (i32, i32) {
    %c0_i32 = arith.constant 0 : i32
    %c0_i32_0 = arith.constant 0 : i32
    %c0_i32_1 = arith.constant 0 : i32
    return %c0_i32, %c0_i32_0 : i32, i32
  }
  func.func @transform_19(%arg0: i32) -> (i32, i32) {
    %c0_i32 = arith.constant 0 : i32
    %c0_i32_0 = arith.constant 0 : i32
    %c0_i32_1 = arith.constant 0 : i32
    return %c0_i32, %c0_i32_0 : i32, i32
  }
  func.func @transform_20(%arg0: i32) -> (i32, i32) {
    %c0_i32 = arith.constant 0 : i32
    %c0_i32_0 = arith.constant 0 : i32
    %c0_i32_1 = arith.constant 0 : i32
    return %c0_i32, %c0_i32_0 : i32, i32
  }
  func.func @transform_21(%arg0: i32) -> (i32, i32) {
    %c0_i32 = arith.constant 0 : i32
    %c0_i32_0 = arith.constant 0 : i32
    %c0_i32_1 = arith.constant 0 : i32
    return %c0_i32, %c0_i32_0 : i32, i32
  }
  func.func @transform_22(%arg0: i32) -> (i32, i32, i32) {
    %c0_i32 = arith.constant 0 : i32
    %c0_i32_0 = arith.constant 0 : i32
    %c0_i32_1 = arith.constant 0 : i32
    return %arg0, %c0_i32, %c0_i32_0 : i32, i32, i32
  }
}

</mosaic_0001>

<llo_original>
// kernel: tpu_custom_call.1
$region0: #{tpu_custom_call.1}
  #allocation0 [shape = 'u32[]', space=smem, size = 0x4, offset = 0x4, fixed_abs, tag = 'smem constant byte address 0x4 - core index']
  #allocation1 [shape = 'u32[72,128]{1,0:T(1,128)}', space=vmem, size = 0x9000, scoped, tag = 'internal scratch']
  #allocation2 [shape = 'f32[1,1]{1,0:T(1,128)S(1)}', space=vmem, size = 0x200, scoped, tag = 'scoped memory for tpu_custom_call.1']
  %s0 = inlined_call_operand.vmem [shape: bf16[2,8,32], index: 0, kind: input, shape index: {}]
  %s1 = inlined_call_operand.vmem [shape: bf16[2,8,32], index: 1, kind: input, shape index: {}]
  %s2 = inlined_call_operand.vmem [shape: bf16[32,32], index: 2, kind: input, shape index: {}]
  %s3 = inlined_call_operand.vmem [shape: f32[1,32], index: 3, kind: input, shape index: {}]
  %s4 = inlined_call_operand.vmem [shape: bf16[4,32,8], index: 4, kind: input, shape index: {}]
  %s5 = inlined_call_operand.vmem [shape: f32[4,1,8], index: 5, kind: input, shape index: {}]
  %s6 = inlined_call_operand.vmem [shape: bf16[4,32,8], index: 6, kind: input, shape index: {}]
  %s7 = inlined_call_operand.vmem [shape: f32[4,1,8], index: 7, kind: input, shape index: {}]
  %s8 = inlined_call_operand.vmem [shape: bf16[4,32,8], index: 8, kind: input, shape index: {}]
  %s9 = inlined_call_operand.vmem [shape: f32[4,1,8], index: 9, kind: input, shape index: {}]
  %s10 = inlined_call_operand.vmem [shape: bf16[4,8,32], index: 10, kind: input, shape index: {}]
  %s11 = inlined_call_operand.vmem [shape: f32[1,32], index: 11, kind: input, shape index: {}]
  %s12 = inlined_call_operand.vmem [shape: f32[1,32], index: 12, kind: input, shape index: {}]
  %s13 = inlined_call_operand.vmem [shape: f32[1,32], index: 13, kind: input, shape index: {}]
  %s14 = inlined_call_operand.vmem [shape: bf16[32,32], index: 14, kind: input, shape index: {}]
  %s15 = inlined_call_operand.vmem [shape: f32[1,32], index: 15, kind: input, shape index: {}]
  %s16 = inlined_call_operand.vmem [shape: bf16[32,32], index: 16, kind: input, shape index: {}]
  %s17 = inlined_call_operand.vmem [shape: f32[1,32], index: 17, kind: input, shape index: {}]
  %s18 = inlined_call_operand.vmem [shape: f32[1,32], index: 18, kind: input, shape index: {}]
  %s19 = inlined_call_operand.vmem [shape: f32[1,32], index: 19, kind: input, shape index: {}]
  %s20 = inlined_call_operand.vmem [shape: f32[1,32], index: 20, kind: input, shape index: {}]
  %s21 = inlined_call_operand.<no memory space> [shape: f32[1,1], index: 21, kind: input, shape index: {}]
  %s22 = inlined_call_operand.vmem [shape: f32[2,8,1], index: 22, kind: output, shape index: {}]
  %s23 = sld [smem:[#allocation0]]
  $region121: #{tpu_custom_call.1} parent=0
    _
  %s25 = ssub.s32 1, %s23
  %s26 = scalar_select 0, %s25, %s23
  %v27 = vstv %s21
  %28 = vst [vmem:[#allocation2] sm:$0x1] %v27
  loop: start=0, step=1, limit=4
  $region2: #{tpu_custom_call.1} parent=0 // loop_pre_header
    _
  $region3: #{tpu_custom_call.1} parent=0 // loop_header
    %s30 = sphi 0, %s34
    %p31 = scmp.ge.s32.totalorder %s30, 4
    %s40 = sphi 0, %s42
    %s43 = sphi 0, %s40
    %s44 = sphi 0, %s43
    %s60 = sphi 0, %s44
    %s66 = sphi 0, %s68
    %s69 = sphi 0, %s66
    %s70 = sphi 0, %s69
    %s86 = sphi 0, %s70
    %s90 = sphi 0, %s90
    %s92 = sphi 0, %s90
    %s93 = sphi 0, %s92
    %s107 = sphi 0, %s93
    %s111 = sphi 0, %s111
    %s113 = sphi 0, %s111
    %s114 = sphi 0, %s113
    %s128 = sphi 0, %s114
    %s132 = sphi 0, %s132
    %s134 = sphi 0, %s132
    %s135 = sphi 0, %s134
    %s149 = sphi 0, %s135
    %s153 = sphi 0, %s153
    %s155 = sphi 0, %s153
    %s156 = sphi 0, %s155
    %s170 = sphi 0, %s156
    %s174 = sphi 0, %s174
    %s176 = sphi 0, %s174
    %s177 = sphi 0, %s176
    %s191 = sphi 0, %s177
    %s195 = sphi 0, %s195
    %s197 = sphi 0, %s195
    %s198 = sphi 0, %s197
    %s212 = sphi 0, %s198
    %s216 = sphi 0, %s216
    %s218 = sphi 0, %s216
    %s219 = sphi 0, %s218
    %s233 = sphi 0, %s219
    %s237 = sphi 0, %s237
    %s239 = sphi 0, %s237
    %s240 = sphi 0, %s239
    %s254 = sphi 0, %s240
    %s258 = sphi 0, %s258
    %s260 = sphi 0, %s258
    %s261 = sphi 0, %s260
    %s275 = sphi 0, %s261
    %s279 = sphi 0, %s279
    %s281 = sphi 0, %s279
    %s282 = sphi 0, %s281
    %s296 = sphi 0, %s282
    %s300 = sphi 0, %s300
    %s302 = sphi 0, %s300
    %s303 = sphi 0, %s302
    %s317 = sphi 0, %s303
    %s321 = sphi 0, %s321
    %s323 = sphi 0, %s321
    %s324 = sphi 0, %s323
    %s338 = sphi 0, %s324
    %s342 = sphi 0, %s342
    %s344 = sphi 0, %s342
    %s345 = sphi 0, %s344
    %s359 = sphi 0, %s345
    %s363 = sphi 0, %s363
    %s365 = sphi 0, %s363
    %s366 = sphi 0, %s365
    %s380 = sphi 0, %s366
    %s384 = sphi 0, %s384
    %s386 = sphi 0, %s384
    %s387 = sphi 0, %s386
    %s401 = sphi 0, %s387
    %s405 = sphi 0, %s405
    %s407 = sphi 0, %s405
    %s408 = sphi 0, %s407
    %s422 = sphi 0, %s408
    %s426 = sphi 0, %s426
    %s428 = sphi 0, %s426
    %s429 = sphi 0, %s428
    %s443 = sphi 0, %s429
    %s447 = sphi 0, %s447
    %s449 = sphi 0, %s447
    %s450 = sphi 0, %s449
    %s464 = sphi 0, %s450
    %s468 = sphi 0, %s468
    %s470 = sphi 0, %s468
    %s471 = sphi 0, %s470
    %s485 = sphi 0, %s471
    %s489 = sphi 0, %s489
    %s491 = sphi 0, %s489
    %s492 = sphi 0, %s491
    %s506 = sphi 0, %s492
    %s512 = sphi 0, %s514
    %s515 = sphi 0, %s512
    %s516 = sphi 0, %s515
    %s532 = sphi 0, %s516
  $region4: #{tpu_custom_call.1} parent=0 // loop_header_branch
    %33 = sbr.rel (%p31) target = $region8
  $region5: #{tpu_custom_call.1} parent=0 // loop_body
    %s35 = ssub.s32 %s30, 1
    %s36 = ssub.s32 %s30, 2
    %s37 = sadd.s32 %s30, 1
    %s38 = ssub.s32 %s30, %s37
    %p39 = scmp.eq.s32.totalorder %s38, 0
    %s41 = sadd.s32 %s40, 1
    %s42 = scalar_select %p39, %s40, %s41
    %p45 = pneg %p39
    %p46 = scmp.eq.s32.totalorder %s30, 1
    %p47 = por %p45, %p46
    %p48 = scmp.ne.s32.totalorder %s40, %s43
    %p49 = scmp.eq.s32.totalorder %s30, 0
    %p50 = por %p48, %p49
    %p51 = scmp.ne.s32.totalorder %s40, %s43
    %p52 = scmp.eq.s32.totalorder %s35, 1
    %p53 = por %p51, %p52
    %p54 = scmp.ne.s32.totalorder %s43, %s44
    %p55 = scmp.eq.s32.totalorder %s35, 0
    %p56 = por %p54, %p55
    %p57 = scmp.ne.s32.totalorder %s43, %s44
    %p58 = scmp.eq.s32.totalorder %s36, 1
    %p59 = por %p57, %p58
    %p61 = scmp.ne.s32.totalorder %s44, %s60
    %p62 = scmp.eq.s32.totalorder %s36, 0
    %p63 = por %p61, %p62
    %s64 = ssub.s32 %s30, %s37
    %p65 = scmp.eq.s32.totalorder %s64, 0
    %s67 = sadd.s32 %s66, 1
    %s68 = scalar_select %p65, %s66, %s67
    %p71 = pneg %p65
    %p72 = scmp.eq.s32.totalorder %s30, 1
    %p73 = por %p71, %p72
    %p74 = scmp.ne.s32.totalorder %s66, %s69
    %p75 = scmp.eq.s32.totalorder %s30, 0
    %p76 = por %p74, %p75
    %p77 = scmp.ne.s32.totalorder %s66, %s69
    %p78 = scmp.eq.s32.totalorder %s35, 1
    %p79 = por %p77, %p78
    %p80 = scmp.ne.s32.totalorder %s69, %s70
    %p81 = scmp.eq.s32.totalorder %s35, 0
    %p82 = por %p80, %p81
    %p83 = scmp.ne.s32.totalorder %s69, %s70
    %p84 = scmp.eq.s32.totalorder %s36, 1
    %p85 = por %p83, %p84
    %p87 = scmp.ne.s32.totalorder %s70, %s86
    %p88 = scmp.eq.s32.totalorder %s36, 0
    %p89 = por %p87, %p88
    %s91 = sadd.s32 %s90, 1
    %p94 = scmp.eq.s32.totalorder %s30, 1
    %p95 = scmp.ne.s32.totalorder %s90, %s92
    %p96 = scmp.eq.s32.totalorder %s30, 0
    %p97 = por %p95, %p96
    %p98 = scmp.ne.s32.totalorder %s90, %s92
    %p99 = scmp.eq.s32.totalorder %s35, 1
    %p100 = por %p98, %p99
    %p101 = scmp.ne.s32.totalorder %s92, %s93
    %p102 = scmp.eq.s32.totalorder %s35, 0
    %p103 = por %p101, %p102
    %p104 = scmp.ne.s32.totalorder %s92, %s93
    %p105 = scmp.eq.s32.totalorder %s36, 1
    %p106 = por %p104, %p105
    %p108 = scmp.ne.s32.totalorder %s93, %s107
    %p109 = scmp.eq.s32.totalorder %s36, 0
    %p110 = por %p108, %p109
    %s112 = sadd.s32 %s111, 1
    %p115 = scmp.eq.s32.totalorder %s30, 1
    %p116 = scmp.ne.s32.totalorder %s111, %s113
    %p117 = scmp.eq.s32.totalorder %s30, 0
    %p118 = por %p116, %p117
    %p119 = scmp.ne.s32.totalorder %s111, %s113
    %p120 = scmp.eq.s32.totalorder %s35, 1
    %p121 = por %p119, %p120
    %p122 = scmp.ne.s32.totalorder %s113, %s114
    %p123 = scmp.eq.s32.totalorder %s35, 0
    %p124 = por %p122, %p123
    %p125 = scmp.ne.s32.totalorder %s113, %s114
    %p126 = scmp.eq.s32.totalorder %s36, 1
    %p127 = por %p125, %p126
    %p129 = scmp.ne.s32.totalorder %s114, %s128
    %p130 = scmp.eq.s32.totalorder %s36, 0
    %p131 = por %p129, %p130
    %s133 = sadd.s32 %s132, 1
    %p136 = scmp.eq.s32.totalorder %s30, 1
    %p137 = scmp.ne.s32.totalorder %s132, %s134
    %p138 = scmp.eq.s32.totalorder %s30, 0
    %p139 = por %p137, %p138
    %p140 = scmp.ne.s32.totalorder %s132, %s134
    %p141 = scmp.eq.s32.totalorder %s35, 1
    %p142 = por %p140, %p141
    %p143 = scmp.ne.s32.totalorder %s134, %s135
    %p144 = scmp.eq.s32.totalorder %s35, 0
    %p145 = por %p143, %p144
    %p146 = scmp.ne.s32.totalorder %s134, %s135
    %p147 = scmp.eq.s32.totalorder %s36, 1
    %p148 = por %p146, %p147
    %p150 = scmp.ne.s32.totalorder %s135, %s149
    %p151 = scmp.eq.s32.totalorder %s36, 0
    %p152 = por %p150, %p151
    %s154 = sadd.s32 %s153, 1
    %p157 = scmp.eq.s32.totalorder %s30, 1
    %p158 = scmp.ne.s32.totalorder %s153, %s155
    %p159 = scmp.eq.s32.totalorder %s30, 0
    %p160 = por %p158, %p159
    %p161 = scmp.ne.s32.totalorder %s153, %s155
    %p162 = scmp.eq.s32.totalorder %s35, 1
    %p163 = por %p161, %p162
    %p164 = scmp.ne.s32.totalorder %s155, %s156
    %p165 = scmp.eq.s32.totalorder %s35, 0
    %p166 = por %p164, %p165
    %p167 = scmp.ne.s32.totalorder %s155, %s156
    %p168 = scmp.eq.s32.totalorder %s36, 1
    %p169 = por %p167, %p168
    %p171 = scmp.ne.s32.totalorder %s156, %s170
    %p172 = scmp.eq.s32.totalorder %s36, 0
    %p173 = por %p171, %p172
    %s175 = sadd.s32 %s174, 1
    %p178 = scmp.eq.s32.totalorder %s30, 1
    %p179 = scmp.ne.s32.totalorder %s174, %s176
    %p180 = scmp.eq.s32.totalorder %s30, 0
    %p181 = por %p179, %p180
    %p182 = scmp.ne.s32.totalorder %s174, %s176
    %p183 = scmp.eq.s32.totalorder %s35, 1
    %p184 = por %p182, %p183
    %p185 = scmp.ne.s32.totalorder %s176, %s177
    %p186 = scmp.eq.s32.totalorder %s35, 0
    %p187 = por %p185, %p186
    %p188 = scmp.ne.s32.totalorder %s176, %s177
    %p189 = scmp.eq.s32.totalorder %s36, 1
    %p190 = por %p188, %p189
    %p192 = scmp.ne.s32.totalorder %s177, %s191
    %p193 = scmp.eq.s32.totalorder %s36, 0
    %p194 = por %p192, %p193
    %s196 = sadd.s32 %s195, 1
    %p199 = scmp.eq.s32.totalorder %s30, 1
    %p200 = scmp.ne.s32.totalorder %s195, %s197
    %p201 = scmp.eq.s32.totalorder %s30, 0
    %p202 = por %p200, %p201
    %p203 = scmp.ne.s32.totalorder %s195, %s197
    %p204 = scmp.eq.s32.totalorder %s35, 1
    %p205 = por %p203, %p204
    %p206 = scmp.ne.s32.totalorder %s197, %s198
    %p207 = scmp.eq.s32.totalorder %s35, 0
    %p208 = por %p206, %p207
    %p209 = scmp.ne.s32.totalorder %s197, %s198
    %p210 = scmp.eq.s32.totalorder %s36, 1
    %p211 = por %p209, %p210
    %p213 = scmp.ne.s32.totalorder %s198, %s212
    %p214 = scmp.eq.s32.totalorder %s36, 0
    %p215 = por %p213, %p214
    %s217 = sadd.s32 %s216, 1
    %p220 = scmp.eq.s32.totalorder %s30, 1
    %p221 = scmp.ne.s32.totalorder %s216, %s218
    %p222 = scmp.eq.s32.totalorder %s30, 0
    %p223 = por %p221, %p222
    %p224 = scmp.ne.s32.totalorder %s216, %s218
    %p225 = scmp.eq.s32.totalorder %s35, 1
    %p226 = por %p224, %p225
    %p227 = scmp.ne.s32.totalorder %s218, %s219
    %p228 = scmp.eq.s32.totalorder %s35, 0
    %p229 = por %p227, %p228
    %p230 = scmp.ne.s32.totalorder %s218, %s219
    %p231 = scmp.eq.s32.totalorder %s36, 1
    %p232 = por %p230, %p231
    %p234 = scmp.ne.s32.totalorder %s219, %s233
    %p235 = scmp.eq.s32.totalorder %s36, 0
    %p236 = por %p234, %p235
    %s238 = sadd.s32 %s237, 1
    %p241 = scmp.eq.s32.totalorder %s30, 1
    %p242 = scmp.ne.s32.totalorder %s237, %s239
    %p243 = scmp.eq.s32.totalorder %s30, 0
    %p244 = por %p242, %p243
    %p245 = scmp.ne.s32.totalorder %s237, %s239
    %p246 = scmp.eq.s32.totalorder %s35, 1
    %p247 = por %p245, %p246
    %p248 = scmp.ne.s32.totalorder %s239, %s240
    %p249 = scmp.eq.s32.totalorder %s35, 0
    %p250 = por %p248, %p249
    %p251 = scmp.ne.s32.totalorder %s239, %s240
    %p252 = scmp.eq.s32.totalorder %s36, 1
    %p253 = por %p251, %p252
    %p255 = scmp.ne.s32.totalorder %s240, %s254
    %p256 = scmp.eq.s32.totalorder %s36, 0
    %p257 = por %p255, %p256
    %s259 = sadd.s32 %s258, 1
    %p262 = scmp.eq.s32.totalorder %s30, 1
    %p263 = scmp.ne.s32.totalorder %s258, %s260
    %p264 = scmp.eq.s32.totalorder %s30, 0
    %p265 = por %p263, %p264
    %p266 = scmp.ne.s32.totalorder %s258, %s260
    %p267 = scmp.eq.s32.totalorder %s35, 1
    %p268 = por %p266, %p267
    %p269 = scmp.ne.s32.totalorder %s260, %s261
    %p270 = scmp.eq.s32.totalorder %s35, 0
    %p271 = por %p269, %p270
    %p272 = scmp.ne.s32.totalorder %s260, %s261
    %p273 = scmp.eq.s32.totalorder %s36, 1
    %p274 = por %p272, %p273
    %p276 = scmp.ne.s32.totalorder %s261, %s275
    %p277 = scmp.eq.s32.totalorder %s36, 0
    %p278 = por %p276, %p277
    %s280 = sadd.s32 %s279, 1
    %p283 = scmp.eq.s32.totalorder %s30, 1
    %p284 = scmp.ne.s32.totalorder %s279, %s281
    %p285 = scmp.eq.s32.totalorder %s30, 0
    %p286 = por %p284, %p285
    %p287 = scmp.ne.s32.totalorder %s279, %s281
    %p288 = scmp.eq.s32.totalorder %s35, 1
    %p289 = por %p287, %p288
    %p290 = scmp.ne.s32.totalorder %s281, %s282
    %p291 = scmp.eq.s32.totalorder %s35, 0
    %p292 = por %p290, %p291
    %p293 = scmp.ne.s32.totalorder %s281, %s282
    %p294 = scmp.eq.s32.totalorder %s36, 1
    %p295 = por %p293, %p294
    %p297 = scmp.ne.s32.totalorder %s282, %s296
    %p298 = scmp.eq.s32.totalorder %s36, 0
    %p299 = por %p297, %p298
    %s301 = sadd.s32 %s300, 1
    %p304 = scmp.eq.s32.totalorder %s30, 1
    %p305 = scmp.ne.s32.totalorder %s300, %s302
    %p306 = scmp.eq.s32.totalorder %s30, 0
    %p307 = por %p305, %p306
    %p308 = scmp.ne.s32.totalorder %s300, %s302
    %p309 = scmp.eq.s32.totalorder %s35, 1
    %p310 = por %p308, %p309
    %p311 = scmp.ne.s32.totalorder %s302, %s303
    %p312 = scmp.eq.s32.totalorder %s35, 0
    %p313 = por %p311, %p312
    %p314 = scmp.ne.s32.totalorder %s302, %s303
    %p315 = scmp.eq.s32.totalorder %s36, 1
    %p316 = por %p314, %p315
    %p318 = scmp.ne.s32.totalorder %s303, %s317
    %p319 = scmp.eq.s32.totalorder %s36, 0
    %p320 = por %p318, %p319
    %s322 = sadd.s32 %s321, 1
    %p325 = scmp.eq.s32.totalorder %s30, 1
    %p326 = scmp.ne.s32.totalorder %s321, %s323
    %p327 = scmp.eq.s32.totalorder %s30, 0
    %p328 = por %p326, %p327
    %p329 = scmp.ne.s32.totalorder %s321, %s323
    %p330 = scmp.eq.s32.totalorder %s35, 1
    %p331 = por %p329, %p330
    %p332 = scmp.ne.s32.totalorder %s323, %s324
    %p333 = scmp.eq.s32.totalorder %s35, 0
    %p334 = por %p332, %p333
    %p335 = scmp.ne.s32.totalorder %s323, %s324
    %p336 = scmp.eq.s32.totalorder %s36, 1
    %p337 = por %p335, %p336
    %p339 = scmp.ne.s32.totalorder %s324, %s338
    %p340 = scmp.eq.s32.totalorder %s36, 0
    %p341 = por %p339, %p340
    %s343 = sadd.s32 %s342, 1
    %p346 = scmp.eq.s32.totalorder %s30, 1
    %p347 = scmp.ne.s32.totalorder %s342, %s344
    %p348 = scmp.eq.s32.totalorder %s30, 0
    %p349 = por %p347, %p348
    %p350 = scmp.ne.s32.totalorder %s342, %s344
    %p351 = scmp.eq.s32.totalorder %s35, 1
    %p352 = por %p350, %p351
    %p353 = scmp.ne.s32.totalorder %s344, %s345
    %p354 = scmp.eq.s32.totalorder %s35, 0
    %p355 = por %p353, %p354
    %p356 = scmp.ne.s32.totalorder %s344, %s345
    %p357 = scmp.eq.s32.totalorder %s36, 1
    %p358 = por %p356, %p357
    %p360 = scmp.ne.s32.totalorder %s345, %s359
    %p361 = scmp.eq.s32.totalorder %s36, 0
    %p362 = por %p360, %p361
    %s364 = sadd.s32 %s363, 1
    %p367 = scmp.eq.s32.totalorder %s30, 1
    %p368 = scmp.ne.s32.totalorder %s363, %s365
    %p369 = scmp.eq.s32.totalorder %s30, 0
    %p370 = por %p368, %p369
    %p371 = scmp.ne.s32.totalorder %s363, %s365
    %p372 = scmp.eq.s32.totalorder %s35, 1
    %p373 = por %p371, %p372
    %p374 = scmp.ne.s32.totalorder %s365, %s366
    %p375 = scmp.eq.s32.totalorder %s35, 0
    %p376 = por %p374, %p375
    %p377 = scmp.ne.s32.totalorder %s365, %s366
    %p378 = scmp.eq.s32.totalorder %s36, 1
    %p379 = por %p377, %p378
    %p381 = scmp.ne.s32.totalorder %s366, %s380
    %p382 = scmp.eq.s32.totalorder %s36, 0
    %p383 = por %p381, %p382
    %s385 = sadd.s32 %s384, 1
    %p388 = scmp.eq.s32.totalorder %s30, 1
    %p389 = scmp.ne.s32.totalorder %s384, %s386
    %p390 = scmp.eq.s32.totalorder %s30, 0
    %p391 = por %p389, %p390
    %p392 = scmp.ne.s32.totalorder %s384, %s386
    %p393 = scmp.eq.s32.totalorder %s35, 1
    %p394 = por %p392, %p393
    %p395 = scmp.ne.s32.totalorder %s386, %s387
    %p396 = scmp.eq.s32.totalorder %s35, 0
    %p397 = por %p395, %p396
    %p398 = scmp.ne.s32.totalorder %s386, %s387
    %p399 = scmp.eq.s32.totalorder %s36, 1
    %p400 = por %p398, %p399
    %p402 = scmp.ne.s32.totalorder %s387, %s401
    %p403 = scmp.eq.s32.totalorder %s36, 0
    %p404 = por %p402, %p403
    %s406 = sadd.s32 %s405, 1
    %p409 = scmp.eq.s32.totalorder %s30, 1
    %p410 = scmp.ne.s32.totalorder %s405, %s407
    %p411 = scmp.eq.s32.totalorder %s30, 0
    %p412 = por %p410, %p411
    %p413 = scmp.ne.s32.totalorder %s405, %s407
    %p414 = scmp.eq.s32.totalorder %s35, 1
    %p415 = por %p413, %p414
    %p416 = scmp.ne.s32.totalorder %s407, %s408
    %p417 = scmp.eq.s32.totalorder %s35, 0
    %p418 = por %p416, %p417
    %p419 = scmp.ne.s32.totalorder %s407, %s408
    %p420 = scmp.eq.s32.totalorder %s36, 1
    %p421 = por %p419, %p420
    %p423 = scmp.ne.s32.totalorder %s408, %s422
    %p424 = scmp.eq.s32.totalorder %s36, 0
    %p425 = por %p423, %p424
    %s427 = sadd.s32 %s426, 1
    %p430 = scmp.eq.s32.totalorder %s30, 1
    %p431 = scmp.ne.s32.totalorder %s426, %s428
    %p432 = scmp.eq.s32.totalorder %s30, 0
    %p433 = por %p431, %p432
    %p434 = scmp.ne.s32.totalorder %s426, %s428
    %p435 = scmp.eq.s32.totalorder %s35, 1
    %p436 = por %p434, %p435
    %p437 = scmp.ne.s32.totalorder %s428, %s429
    %p438 = scmp.eq.s32.totalorder %s35, 0
    %p439 = por %p437, %p438
    %p440 = scmp.ne.s32.totalorder %s428, %s429
    %p441 = scmp.eq.s32.totalorder %s36, 1
    %p442 = por %p440, %p441
    %p444 = scmp.ne.s32.totalorder %s429, %s443
    %p445 = scmp.eq.s32.totalorder %s36, 0
    %p446 = por %p444, %p445
    %s448 = sadd.s32 %s447, 1
    %p451 = scmp.eq.s32.totalorder %s30, 1
    %p452 = scmp.ne.s32.totalorder %s447, %s449
    %p453 = scmp.eq.s32.totalorder %s30, 0
    %p454 = por %p452, %p453
    %p455 = scmp.ne.s32.totalorder %s447, %s449
    %p456 = scmp.eq.s32.totalorder %s35, 1
    %p457 = por %p455, %p456
    %p458 = scmp.ne.s32.totalorder %s449, %s450
    %p459 = scmp.eq.s32.totalorder %s35, 0
    %p460 = por %p458, %p459
    %p461 = scmp.ne.s32.totalorder %s449, %s450
    %p462 = scmp.eq.s32.totalorder %s36, 1
    %p463 = por %p461, %p462
    %p465 = scmp.ne.s32.totalorder %s450, %s464
    %p466 = scmp.eq.s32.totalorder %s36, 0
    %p467 = por %p465, %p466
    %s469 = sadd.s32 %s468, 1
    %p472 = scmp.eq.s32.totalorder %s30, 1
    %p473 = scmp.ne.s32.totalorder %s468, %s470
    %p474 = scmp.eq.s32.totalorder %s30, 0
    %p475 = por %p473, %p474
    %p476 = scmp.ne.s32.totalorder %s468, %s470
    %p477 = scmp.eq.s32.totalorder %s35, 1
    %p478 = por %p476, %p477
    %p479 = scmp.ne.s32.totalorder %s470, %s471
    %p480 = scmp.eq.s32.totalorder %s35, 0
    %p481 = por %p479, %p480
    %p482 = scmp.ne.s32.totalorder %s470, %s471
    %p483 = scmp.eq.s32.totalorder %s36, 1
    %p484 = por %p482, %p483
    %p486 = scmp.ne.s32.totalorder %s471, %s485
    %p487 = scmp.eq.s32.totalorder %s36, 0
    %p488 = por %p486, %p487
    %s490 = sadd.s32 %s489, 1
    %p493 = scmp.eq.s32.totalorder %s30, 1
    %p494 = scmp.ne.s32.totalorder %s489, %s491
    %p495 = scmp.eq.s32.totalorder %s30, 0
    %p496 = por %p494, %p495
    %p497 = scmp.ne.s32.totalorder %s489, %s491
    %p498 = scmp.eq.s32.totalorder %s35, 1
    %p499 = por %p497, %p498
    %p500 = scmp.ne.s32.totalorder %s491, %s492
    %p501 = scmp.eq.s32.totalorder %s35, 0
    %p502 = por %p500, %p501
    %p503 = scmp.ne.s32.totalorder %s491, %s492
    %p504 = scmp.eq.s32.totalorder %s36, 1
    %p505 = por %p503, %p504
    %p507 = scmp.ne.s32.totalorder %s492, %s506
    %p508 = scmp.eq.s32.totalorder %s36, 0
    %p509 = por %p507, %p508
    %s510 = ssub.s32 %s30, %s37
    %p511 = scmp.eq.s32.totalorder %s510, 0
    %s513 = sadd.s32 %s512, 1
    %s514 = scalar_select %p511, %s512, %s513
    %p517 = pneg %p511
    %p518 = scmp.eq.s32.totalorder %s30, 1
    %p519 = por %p517, %p518
    %p520 = scmp.ne.s32.totalorder %s512, %s515
    %p521 = scmp.eq.s32.totalorder %s30, 0
    %p522 = por %p520, %p521
    %p523 = scmp.ne.s32.totalorder %s512, %s515
    %p524 = scmp.eq.s32.totalorder %s35, 1
    %p525 = por %p523, %p524
    %p526 = scmp.ne.s32.totalorder %s515, %s516
    %p527 = scmp.eq.s32.totalorder %s35, 0
    %p528 = por %p526, %p527
    %p529 = scmp.ne.s32.totalorder %s515, %s516
    %p530 = scmp.eq.s32.totalorder %s36, 1
    %p531 = por %p529, %p530
    %p533 = scmp.ne.s32.totalorder %s516, %s532
    %p534 = scmp.eq.s32.totalorder %s36, 0
    %p535 = por %p533, %p534
    %p536 = scmp.le.s32.totalorder 1, %s30
    %p537 = scmp.lt.s32.totalorder %s30, 3
    %p538 = pnand %p536, %p537
    %p539 = pneg %p538
    // Predicated region
    $region9: #{tpu_custom_call.1} parent=5 // pred_check
      _
    $region10: #{tpu_custom_call.1} parent=5 // pred_check_branch
      %541 = sbr.rel (%p538) target = $region12
    $region11: #{tpu_custom_call.1} parent=5 // pred_region
      %s542 = ssub.s32 %s30, 1
      // Predicated region
      $region13: #{tpu_custom_call.1} parent=11 // pred_check
        %p543 = pneg %p103
      $region14: #{tpu_custom_call.1} parent=11 // pred_check_branch
        %545 = sbr.rel (%p543) target = $region16
      $region15: #{tpu_custom_call.1} parent=11 // pred_region
        _
      $region16: #{tpu_custom_call.1} parent=11 // pred_fallthru
        _
      // Predicated region
      $region17: #{tpu_custom_call.1} parent=11 // pred_check
        %p546 = pneg %p124
      $region18: #{tpu_custom_call.1} parent=11 // pred_check_branch
        %548 = sbr.rel (%p546) target = $region20
      $region19: #{tpu_custom_call.1} parent=11 // pred_region
        _
      $region20: #{tpu_custom_call.1} parent=11 // pred_fallthru
        _
      // Predicated region
      $region21: #{tpu_custom_call.1} parent=11 // pred_check
        %p549 = pneg %p145
      $region22: #{tpu_custom_call.1} parent=11 // pred_check_branch
        %551 = sbr.rel (%p549) target = $region24
      $region23: #{tpu_custom_call.1} parent=11 // pred_region
        _
      $region24: #{tpu_custom_call.1} parent=11 // pred_fallthru
        _
      // Predicated region
      $region25: #{tpu_custom_call.1} parent=11 // pred_check
        %p552 = pneg %p166
      $region26: #{tpu_custom_call.1} parent=11 // pred_check_branch
        %554 = sbr.rel (%p552) target = $region28
      $region27: #{tpu_custom_call.1} parent=11 // pred_region
        _
      $region28: #{tpu_custom_call.1} parent=11 // pred_fallthru
        _
      // Predicated region
      $region29: #{tpu_custom_call.1} parent=11 // pred_check
        %p555 = pneg %p187
      $region30: #{tpu_custom_call.1} parent=11 // pred_check_branch
        %557 = sbr.rel (%p555) target = $region32
      $region31: #{tpu_custom_call.1} parent=11 // pred_region
        _
      $region32: #{tpu_custom_call.1} parent=11 // pred_fallthru
        _
      // Predicated region
      $region33: #{tpu_custom_call.1} parent=11 // pred_check
        %p558 = pneg %p208
      $region34: #{tpu_custom_call.1} parent=11 // pred_check_branch
        %560 = sbr.rel (%p558) target = $region36
      $region35: #{tpu_custom_call.1} parent=11 // pred_region
        _
      $region36: #{tpu_custom_call.1} parent=11 // pred_fallthru
        _
      // Predicated region
      $region37: #{tpu_custom_call.1} parent=11 // pred_check
        %p561 = pneg %p229
      $region38: #{tpu_custom_call.1} parent=11 // pred_check_branch
        %563 = sbr.rel (%p561) target = $region40
      $region39: #{tpu_custom_call.1} parent=11 // pred_region
        _
      $region40: #{tpu_custom_call.1} parent=11 // pred_fallthru
        _
      // Predicated region
      $region41: #{tpu_custom_call.1} parent=11 // pred_check
        %p564 = pneg %p250
      $region42: #{tpu_custom_call.1} parent=11 // pred_check_branch
        %566 = sbr.rel (%p564) target = $region44
      $region43: #{tpu_custom_call.1} parent=11 // pred_region
        _
      $region44: #{tpu_custom_call.1} parent=11 // pred_fallthru
        _
      // Predicated region
      $region45: #{tpu_custom_call.1} parent=11 // pred_check
        %p567 = pneg %p271
      $region46: #{tpu_custom_call.1} parent=11 // pred_check_branch
        %569 = sbr.rel (%p567) target = $region48
      $region47: #{tpu_custom_call.1} parent=11 // pred_region
        _
      $region48: #{tpu_custom_call.1} parent=11 // pred_fallthru
        _
      // Predicated region
      $region49: #{tpu_custom_call.1} parent=11 // pred_check
        %p570 = pneg %p292
      $region50: #{tpu_custom_call.1} parent=11 // pred_check_branch
        %572 = sbr.rel (%p570) target = $region52
      $region51: #{tpu_custom_call.1} parent=11 // pred_region
        _
      $region52: #{tpu_custom_call.1} parent=11 // pred_fallthru
        _
      // Predicated region
      $region53: #{tpu_custom_call.1} parent=11 // pred_check
        %p573 = pneg %p313
      $region54: #{tpu_custom_call.1} parent=11 // pred_check_branch
        %575 = sbr.rel (%p573) target = $region56
      $region55: #{tpu_custom_call.1} parent=11 // pred_region
        _
      $region56: #{tpu_custom_call.1} parent=11 // pred_fallthru
        _
      // Predicated region
      $region57: #{tpu_custom_call.1} parent=11 // pred_check
        %p576 = pneg %p334
      $region58: #{tpu_custom_call.1} parent=11 // pred_check_branch
        %578 = sbr.rel (%p576) target = $region60
      $region59: #{tpu_custom_call.1} parent=11 // pred_region
        _
      $region60: #{tpu_custom_call.1} parent=11 // pred_fallthru
        _
      // Predicated region
      $region61: #{tpu_custom_call.1} parent=11 // pred_check
        %p579 = pneg %p355
      $region62: #{tpu_custom_call.1} parent=11 // pred_check_branch
        %581 = sbr.rel (%p579) target = $region64
      $region63: #{tpu_custom_call.1} parent=11 // pred_region
        _
      $region64: #{tpu_custom_call.1} parent=11 // pred_fallthru
        _
      // Predicated region
      $region65: #{tpu_custom_call.1} parent=11 // pred_check
        %p582 = pneg %p376
      $region66: #{tpu_custom_call.1} parent=11 // pred_check_branch
        %584 = sbr.rel (%p582) target = $region68
      $region67: #{tpu_custom_call.1} parent=11 // pred_region
        _
      $region68: #{tpu_custom_call.1} parent=11 // pred_fallthru
        _
      // Predicated region
      $region69: #{tpu_custom_call.1} parent=11 // pred_check
        %p585 = pneg %p397
      $region70: #{tpu_custom_call.1} parent=11 // pred_check_branch
        %587 = sbr.rel (%p585) target = $region72
      $region71: #{tpu_custom_call.1} parent=11 // pred_region
        _
      $region72: #{tpu_custom_call.1} parent=11 // pred_fallthru
        _
      // Predicated region
      $region73: #{tpu_custom_call.1} parent=11 // pred_check
        %p588 = pneg %p418
      $region74: #{tpu_custom_call.1} parent=11 // pred_check_branch
        %590 = sbr.rel (%p588) target = $region76
      $region75: #{tpu_custom_call.1} parent=11 // pred_region
        _
      $region76: #{tpu_custom_call.1} parent=11 // pred_fallthru
        _
      // Predicated region
      $region77: #{tpu_custom_call.1} parent=11 // pred_check
        %p591 = pneg %p439
      $region78: #{tpu_custom_call.1} parent=11 // pred_check_branch
        %593 = sbr.rel (%p591) target = $region80
      $region79: #{tpu_custom_call.1} parent=11 // pred_region
        _
      $region80: #{tpu_custom_call.1} parent=11 // pred_fallthru
        _
      // Predicated region
      $region81: #{tpu_custom_call.1} parent=11 // pred_check
        %p594 = pneg %p460
      $region82: #{tpu_custom_call.1} parent=11 // pred_check_branch
        %596 = sbr.rel (%p594) target = $region84
      $region83: #{tpu_custom_call.1} parent=11 // pred_region
        _
      $region84: #{tpu_custom_call.1} parent=11 // pred_fallthru
        _
      // Predicated region
      $region85: #{tpu_custom_call.1} parent=11 // pred_check
        %p597 = pneg %p481
      $region86: #{tpu_custom_call.1} parent=11 // pred_check_branch
        %599 = sbr.rel (%p597) target = $region88
      $region87: #{tpu_custom_call.1} parent=11 // pred_region
        _
      $region88: #{tpu_custom_call.1} parent=11 // pred_fallthru
        _
      // Predicated region
      $region89: #{tpu_custom_call.1} parent=11 // pred_check
        %p600 = pneg %p502
      $region90: #{tpu_custom_call.1} parent=11 // pred_check_branch
        %602 = sbr.rel (%p600) target = $region92
      $region91: #{tpu_custom_call.1} parent=11 // pred_region
        _
      $region92: #{tpu_custom_call.1} parent=11 // pred_fallthru
        _
    $region12: #{tpu_custom_call.1} parent=5 // pred_fallthru
      _
    %p603 = scmp.lt.s32.totalorder %s30, 2
    // Predicated region
    $region93: #{tpu_custom_call.1} parent=5 // pred_check
      %p604 = pneg %p603
    $region94: #{tpu_custom_call.1} parent=5 // pred_check_branch
      %606 = sbr.rel (%p604) target = $region96
    $region95: #{tpu_custom_call.1} parent=5 // pred_region
      // Predicated region
      $region97: #{tpu_custom_call.1} parent=95 // pred_check
        %p607 = pneg %p50
      $region98: #{tpu_custom_call.1} parent=95 // pred_check_branch
        %609 = sbr.rel (%p607) target = $region100
      $region99: #{tpu_custom_call.1} parent=95 // pred_region
        %p610 = scmp.lt.s32.totalorder %s30, 1
        %s611 = scalar_select %p610, %s30, 1
        %s612 = smul.addr %s611, 4
        %s613 = scalar_lea.vmem %s0, %s612
      $region100: #{tpu_custom_call.1} parent=95 // pred_fallthru
        _
      // Predicated region
      $region101: #{tpu_custom_call.1} parent=95 // pred_check
        %p614 = pneg %p76
      $region102: #{tpu_custom_call.1} parent=95 // pred_check_branch
        %616 = sbr.rel (%p614) target = $region104
      $region103: #{tpu_custom_call.1} parent=95 // pred_region
        %p617 = scmp.lt.s32.totalorder %s30, 1
        %s618 = scalar_select %p617, %s30, 1
        %s619 = smul.addr %s618, 4
        %s620 = scalar_lea.vmem %s1, %s619
      $region104: #{tpu_custom_call.1} parent=95 // pred_fallthru
        _
    $region96: #{tpu_custom_call.1} parent=5 // pred_fallthru
      _
    %p621 = scmp.le.s32.totalorder 1, %s30
    %p622 = scmp.lt.s32.totalorder %s30, 3
    %p623 = pnand %p621, %p622
    %p624 = pneg %p623
    // Predicated region
    $region105: #{tpu_custom_call.1} parent=5 // pred_check
      _
    $region106: #{tpu_custom_call.1} parent=5 // pred_check_branch
      %626 = sbr.rel (%p623) target = $region108
    $region107: #{tpu_custom_call.1} parent=5 // pred_region
      %s627 = ssub.s32 %s30, 1
      %p628 = scmp.lt.s32.totalorder %s35, 1
      %s629 = scalar_select %p628, %s35, 1
      %s630 = smul.addr %s629, 4
      %s631 = scalar_lea.vmem %s0, %s630
      %p632 = pneg %p56
      %p633 = pneg %p53
      %p634 = scmp.lt.s32.totalorder %s35, 1
      %s635 = scalar_select %p634, %s35, 1
      %s636 = smul.addr %s635, 4
      %s637 = scalar_lea.vmem %s1, %s636
      %p638 = pneg %p82
      %p639 = pneg %p79
      %p640 = pneg %p103
      %p641 = pneg %p100
      %p642 = pneg %p124
      %p643 = pneg %p121
      %p644 = pneg %p145
      %p645 = pneg %p142
      %p646 = pneg %p166
      %p647 = pneg %p163
      %p648 = pneg %p187
      %p649 = pneg %p184
      %p650 = pneg %p208
      %p651 = pneg %p205
      %p652 = pneg %p229
      %p653 = pneg %p226
      %p654 = pneg %p250
      %p655 = pneg %p247
      %p656 = pneg %p271
      %p657 = pneg %p268
      %p658 = pneg %p292
      %p659 = pneg %p289
      %p660 = pneg %p313
      %p661 = pneg %p310
      %p662 = pneg %p334
      %p663 = pneg %p331
      %p664 = pneg %p355
      %p665 = pneg %p352
      %p666 = pneg %p376
      %p667 = pneg %p373
      %p668 = pneg %p397
      %p669 = pneg %p394
      %p670 = pneg %p418
      %p671 = pneg %p415
      %p672 = pneg %p439
      %p673 = pneg %p436
      %p674 = pneg %p460
      %p675 = pneg %p457
      %p676 = pneg %p481
      %p677 = pneg %p478
      %p678 = pneg %p502
      %p679 = pneg %p499
      %p680 = pneg %p528
      %p681 = pneg %p525
      %p682 = scmp.lt.s32.totalorder %s35, 1
      %s683 = scalar_select %p682, %s35, 1
      %s684 = smul.addr %s683, 8
      %s685 = scalar_lea.vmem %s22, %s684
      %p686 = scmp.lt.s32.totalorder %s35, 1
      %s687 = scalar_select %p686, %s35, 1
      %s688 = smul.addr %s687, 4
      %s689 = scalar_lea.vmem %s0, %s688
      %p690 = scmp.lt.s32.totalorder %s35, 1
      %s691 = scalar_select %p690, %s35, 1
      %s692 = smul.addr %s691, 4
      %s693 = scalar_lea.vmem %s1, %s692
      %p694 = scmp.lt.s32.totalorder %s35, 1
      %s695 = scalar_select %p694, %s35, 1
      %s696 = smul.addr %s695, 8
      %s697 = scalar_lea.vmem %s22, %s696
      %v699 = vld [vmem:[%s689] sm:$0xf]
      %v700 = vld [vmem:[%s693] sm:$0xf]
      %v701 = vld [vmem:[%s2] sm:$0xf]
      %v702 = vld [vmem:[%s2 + $0x4] sm:$0xf]
      %v703 = vld [vmem:[%s2 + $0x8] sm:$0xf]
      %v704 = vld [vmem:[%s2 + $0xc] sm:$0xf]
      %v705 = vld [vmem:[%s3] sm:$0x1]
      %v707 = vperm.slane %v705, 0
      %v713 = vunpack.c.l.b16 %v701
      %v714 = vunpack.c.l.b16 %v702
      %v715 = vunpack.c.l.b16 %v703
      %v716 = vunpack.c.l.b16 %v704
      %v717 = vpack.c.b16 %v714, %v713
      %v718 = vpack.c.b16 %v716, %v715
      %vm721 = vcmask 261120
      %v723 = vsel %vm721, %v700, 0
      %725 = vmatpush.bf16.msra.mxu0 0
      %726 = vmatpush.bf16.msra.mxu0 0
      %727 = vmatpush.bf16.msra.mxu0 0
      %728 = vmatpush.bf16.msra.mxu0 0
      %729 = vmatpush.bf16.msra.mxu0 0
      %730 = vmatpush.bf16.msra.mxu0 0
      %731 = vmatpush.bf16.msra.mxu0 %v718
      %732 = vmatpush.bf16.msra.mxu0 %v717
      %733 = vmatmul.bf16.gmra.mxu0 %v723
      %v734 = vpop.f32.mrf.mxu0
      %v735 = vadd.f32 %v707, %v734
      %v736 = vpop.f32.mrf.mxu0
      %737 = vdwg.mxu0
      %v738 = vpack.c.bf16 %v735, %v735
      %v739 = vld [vmem:[%s4] sm:$0xf]
      %v740 = vld [vmem:[%s4 + $0x4] sm:$0xf]
      %v741 = vld [vmem:[%s4 + $0x8] sm:$0xf]
      %v742 = vld [vmem:[%s4 + $0xc] sm:$0xf]
      %v743 = vld [vmem:[%s5] sm:$0x1]
      %v745 = vperm.slane %v743, 0
      %v751 = vunpack.c.l.b16 %v739
      %v752 = vunpack.c.l.b16 %v740
      %v753 = vunpack.c.l.b16 %v741
      %v754 = vunpack.c.l.b16 %v742
      %v755 = vpack.c.b16 %v752, %v751
      %v756 = vpack.c.b16 %v754, %v753
      %v760 = vsel %vm721, %v738, 0
      %762 = vmatpush.bf16.msra.mxu0 0
      %763 = vmatpush.bf16.msra.mxu0 0
      %764 = vmatpush.bf16.msra.mxu0 0
      %765 = vmatpush.bf16.msra.mxu0 0
      %766 = vmatpush.bf16.msra.mxu0 0
      %767 = vmatpush.bf16.msra.mxu0 0
      %768 = vmatpush.bf16.msra.mxu0 %v756
      %769 = vmatpush.bf16.msra.mxu0 %v755
      %770 = vmatmul.bf16.gmra.mxu0 %v760
      %v771 = vpop.f32.mrf.mxu0
      %v772 = vadd.f32 %v745, %v771
      %v773 = vpop.f32.mrf.mxu0
      %774 = vdwg.mxu0
      %v775 = vld [vmem:[%s6] sm:$0xf]
      %v776 = vld [vmem:[%s6 + $0x4] sm:$0xf]
      %v777 = vld [vmem:[%s6 + $0x8] sm:$0xf]
      %v778 = vld [vmem:[%s6 + $0xc] sm:$0xf]
      %v779 = vld [vmem:[%s7] sm:$0x1]
      %v781 = vperm.slane %v779, 0
      %v787 = vunpack.c.l.b16 %v775
      %v788 = vunpack.c.l.b16 %v776
      %v789 = vunpack.c.l.b16 %v777
      %v790 = vunpack.c.l.b16 %v778
      %v791 = vpack.c.b16 %v788, %v787
      %v792 = vpack.c.b16 %v790, %v789
      %v796 = vsel %vm721, %v699, 0
      %798 = vmatpush.bf16.msra.mxu0 0
      %799 = vmatpush.bf16.msra.mxu0 0
      %800 = vmatpush.bf16.msra.mxu0 0
      %801 = vmatpush.bf16.msra.mxu0 0
      %802 = vmatpush.bf16.msra.mxu0 0
      %803 = vmatpush.bf16.msra.mxu0 0
      %804 = vmatpush.bf16.msra.mxu0 %v792
      %805 = vmatpush.bf16.msra.mxu0 %v791
      %806 = vmatmul.bf16.gmra.mxu0 %v796
      %v807 = vpop.f32.mrf.mxu0
      %v808 = vadd.f32 %v781, %v807
      %v809 = vpop.f32.mrf.mxu0
      %810 = vdwg.mxu0
      %v811 = vld [vmem:[%s8] sm:$0xf]
      %v812 = vld [vmem:[%s8 + $0x4] sm:$0xf]
      %v813 = vld [vmem:[%s8 + $0x8] sm:$0xf]
      %v814 = vld [vmem:[%s8 + $0xc] sm:$0xf]
      %v815 = vld [vmem:[%s9] sm:$0x1]
      %v817 = vperm.slane %v815, 0
      %v823 = vunpack.c.l.b16 %v811
      %v824 = vunpack.c.l.b16 %v812
      %v825 = vunpack.c.l.b16 %v813
      %v826 = vunpack.c.l.b16 %v814
      %v827 = vpack.c.b16 %v824, %v823
      %v828 = vpack.c.b16 %v826, %v825
      %831 = vmatpush.bf16.msra.mxu0 0
      %832 = vmatpush.bf16.msra.mxu0 0
      %833 = vmatpush.bf16.msra.mxu0 0
      %834 = vmatpush.bf16.msra.mxu0 0
      %835 = vmatpush.bf16.msra.mxu0 0
      %836 = vmatpush.bf16.msra.mxu0 0
      %837 = vmatpush.bf16.msra.mxu0 %v828
      %838 = vmatpush.bf16.msra.mxu0 %v827
      %839 = vmatmul.bf16.gmra.mxu0 %v796
      %v840 = vpop.f32.mrf.mxu0
      %v841 = vadd.f32 %v817, %v840
      %v842 = vpop.f32.mrf.mxu0
      %843 = vdwg.mxu0
      %v844 = vpack.c.bf16 %v772, %v772
      %v845 = vpack.c.bf16 %v808, %v808
      %vm846 = vcmask 64512
      %v848 = vsel %vm846, %v844, 0
      %v851 = vsel %vm846, %v845, 0
      %853 = vmatpush.bf16.xpose.msra.mxu0 0
      %854 = vmatpush.bf16.xpose.msra.mxu0 0
      %855 = vmatpush.bf16.xpose.msra.mxu0 0
      %856 = vmatpush.bf16.xpose.msra.mxu0 0
      %857 = vmatpush.bf16.xpose.msra.mxu0 0
      %858 = vmatpush.bf16.xpose.msra.mxu0 0
      %859 = vmatpush.bf16.xpose.msra.mxu0 0
      %860 = vmatpush.bf16.xpose.msra.mxu0 %v851
      %861 = vmatmul.bf16.gmra.mxu0 %v848
      %v862 = vpop.f32.mrf.mxu0
      %v863 = vadd.f32 0.0, %v862
      %v864 = vpop.f32.mrf.mxu0
      %865 = vdwg.mxu0
      %v866 = vsel %vm846, %v863, -inf
      %867 = vmax.xlane.f32.xlu0 %v866
      %v868 = vpop.xlane.xlu0 %867
      %v869 = vsub.f32 %v863, %v868
      %v870 = vmul.f32 %v869, 1.442695
      %v871 = vpow.pop %v870
      %v872 = vsel %vm846, %v871, 0.0
      %873 = vadd.xlane.f32.xlu0 %v872
      %v874 = vpop.xlane.xlu0 %873
      %v875 = vrcp.pop %v874
      %v876 = vmul.f32 %v871, %v875
      %v877 = vpack.c.bf16 %v876, %v876
      %v878 = vpack.c.bf16 %v841, %v841
      %v880 = vsel %vm846, %v877, 0
      %vm882 = vcmask 1043456
      %v884 = vsel %vm882, %v878, 0
      %886 = vmatpush.bf16.msra.mxu0 0
      %887 = vmatpush.bf16.msra.mxu0 0
      %888 = vmatpush.bf16.msra.mxu0 0
      %889 = vmatpush.bf16.msra.mxu0 0
      %890 = vmatpush.bf16.msra.mxu0 0
      %891 = vmatpush.bf16.msra.mxu0 0
      %892 = vmatpush.bf16.msra.mxu0 0
      %893 = vmatpush.bf16.msra.mxu0 %v884
      %894 = vmatmul.bf16.gmra.mxu0 %v880
      %v895 = vpop.f32.mrf.mxu0
      %v896 = vadd.f32 0.0, %v895
      %v897 = vpop.f32.mrf.mxu0
      %898 = vdwg.mxu0
      %v899 = vpack.c.bf16 %v896, %v896
      %v900 = vld [vmem:[%s10] sm:$0xf]
      %s901 = scalar_lea.vmem %s4, 16
      %v902 = vld [vmem:[%s901] sm:$0xf]
      %v903 = vld [vmem:[%s901 + $0x4] sm:$0xf]
      %v904 = vld [vmem:[%s901 + $0x8] sm:$0xf]
      %v905 = vld [vmem:[%s901 + $0xc] sm:$0xf]
      %s906 = scalar_lea.vmem %s5, 1
      %v907 = vld [vmem:[%s906] sm:$0x1]
      %v909 = vperm.slane %v907, 0
      %v915 = vunpack.c.l.b16 %v902
      %v916 = vunpack.c.l.b16 %v903
      %v917 = vunpack.c.l.b16 %v904
      %v918 = vunpack.c.l.b16 %v905
      %v919 = vpack.c.b16 %v916, %v915
      %v920 = vpack.c.b16 %v918, %v917
      %923 = vmatpush.bf16.msra.mxu0 0
      %924 = vmatpush.bf16.msra.mxu0 0
      %925 = vmatpush.bf16.msra.mxu0 0
      %926 = vmatpush.bf16.msra.mxu0 0
      %927 = vmatpush.bf16.msra.mxu0 0
      %928 = vmatpush.bf16.msra.mxu0 0
      %929 = vmatpush.bf16.msra.mxu0 %v920
      %930 = vmatpush.bf16.msra.mxu0 %v919
      %931 = vmatmul.bf16.gmra.mxu0 %v760
      %v932 = vpop.f32.mrf.mxu0
      %v933 = vadd.f32 %v909, %v932
      %v934 = vpop.f32.mrf.mxu0
      %935 = vdwg.mxu0
      %s936 = scalar_lea.vmem %s6, 16
      %v937 = vld [vmem:[%s936] sm:$0xf]
      %v938 = vld [vmem:[%s936 + $0x4] sm:$0xf]
      %v939 = vld [vmem:[%s936 + $0x8] sm:$0xf]
      %v940 = vld [vmem:[%s936 + $0xc] sm:$0xf]
      %s941 = scalar_lea.vmem %s7, 1
      %v942 = vld [vmem:[%s941] sm:$0x1]
      %v944 = vperm.slane %v942, 0
      %v950 = vunpack.c.l.b16 %v937
      %v951 = vunpack.c.l.b16 %v938
      %v952 = vunpack.c.l.b16 %v939
      %v953 = vunpack.c.l.b16 %v940
      %v954 = vpack.c.b16 %v951, %v950
      %v955 = vpack.c.b16 %v953, %v952
      %958 = vmatpush.bf16.msra.mxu0 0
      %959 = vmatpush.bf16.msra.mxu0 0
      %960 = vmatpush.bf16.msra.mxu0 0
      %961 = vmatpush.bf16.msra.mxu0 0
      %962 = vmatpush.bf16.msra.mxu0 0
      %963 = vmatpush.bf16.msra.mxu0 0
      %964 = vmatpush.bf16.msra.mxu0 %v955
      %965 = vmatpush.bf16.msra.mxu0 %v954
      %966 = vmatmul.bf16.gmra.mxu0 %v796
      %v967 = vpop.f32.mrf.mxu0
      %v968 = vadd.f32 %v944, %v967
      %v969 = vpop.f32.mrf.mxu0
      %970 = vdwg.mxu0
      %s971 = scalar_lea.vmem %s8, 16
      %v972 = vld [vmem:[%s971] sm:$0xf]
      %v973 = vld [vmem:[%s971 + $0x4] sm:$0xf]
      %v974 = vld [vmem:[%s971 + $0x8] sm:$0xf]
      %v975 = vld [vmem:[%s971 + $0xc] sm:$0xf]
      %s976 = scalar_lea.vmem %s9, 1
      %v977 = vld [vmem:[%s976] sm:$0x1]
      %v979 = vperm.slane %v977, 0
      %v985 = vunpack.c.l.b16 %v972
      %v986 = vunpack.c.l.b16 %v973
      %v987 = vunpack.c.l.b16 %v974
      %v988 = vunpack.c.l.b16 %v975
      %v989 = vpack.c.b16 %v986, %v985
      %v990 = vpack.c.b16 %v988, %v987
      %993 = vmatpush.bf16.msra.mxu0 0
      %994 = vmatpush.bf16.msra.mxu0 0
      %995 = vmatpush.bf16.msra.mxu0 0
      %996 = vmatpush.bf16.msra.mxu0 0
      %997 = vmatpush.bf16.msra.mxu0 0
      %998 = vmatpush.bf16.msra.mxu0 0
      %999 = vmatpush.bf16.msra.mxu0 %v990
      %1000 = vmatpush.bf16.msra.mxu0 %v989
      %1001 = vmatmul.bf16.gmra.mxu0 %v796
      %v1002 = vpop.f32.mrf.mxu0
      %v1003 = vadd.f32 %v979, %v1002
      %v1004 = vpop.f32.mrf.mxu0
      %1005 = vdwg.mxu0
      %v1006 = vpack.c.bf16 %v933, %v933
      %v1007 = vpack.c.bf16 %v968, %v968
      %v1009 = vsel %vm846, %v1006, 0
      %v1012 = vsel %vm846, %v1007, 0
      %1014 = vmatpush.bf16.xpose.msra.mxu0 0
      %1015 = vmatpush.bf16.xpose.msra.mxu0 0
      %1016 = vmatpush.bf16.xpose.msra.mxu0 0
      %1017 = vmatpush.bf16.xpose.msra.mxu0 0
      %1018 = vmatpush.bf16.xpose.msra.mxu0 0
      %1019 = vmatpush.bf16.xpose.msra.mxu0 0
      %1020 = vmatpush.bf16.xpose.msra.mxu0 0
      %1021 = vmatpush.bf16.xpose.msra.mxu0 %v1012
      %1022 = vmatmul.bf16.gmra.mxu0 %v1009
      %v1023 = vpop.f32.mrf.mxu0
      %v1024 = vadd.f32 0.0, %v1023
      %v1025 = vpop.f32.mrf.mxu0
      %1026 = vdwg.mxu0
      %v1027 = vsel %vm846, %v1024, -inf
      %1028 = vmax.xlane.f32.xlu0 %v1027
      %v1029 = vpop.xlane.xlu0 %1028
      %v1030 = vsub.f32 %v1024, %v1029
      %v1031 = vmul.f32 %v1030, 1.442695
      %v1032 = vpow.pop %v1031
      %v1033 = vsel %vm846, %v1032, 0.0
      %1034 = vadd.xlane.f32.xlu0 %v1033
      %v1035 = vpop.xlane.xlu0 %1034
      %v1036 = vrcp.pop %v1035
      %v1037 = vmul.f32 %v1032, %v1036
      %v1038 = vpack.c.bf16 %v1037, %v1037
      %v1039 = vpack.c.bf16 %v1003, %v1003
      %v1041 = vsel %vm846, %v1038, 0
      %v1044 = vsel %vm882, %v1039, 0
      %1046 = vmatpush.bf16.msra.mxu0 0
      %1047 = vmatpush.bf16.msra.mxu0 0
      %1048 = vmatpush.bf16.msra.mxu0 0
      %1049 = vmatpush.bf16.msra.mxu0 0
      %1050 = vmatpush.bf16.msra.mxu0 0
      %1051 = vmatpush.bf16.msra.mxu0 0
      %1052 = vmatpush.bf16.msra.mxu0 0
      %1053 = vmatpush.bf16.msra.mxu0 %v1044
      %1054 = vmatmul.bf16.gmra.mxu0 %v1041
      %v1055 = vpop.f32.mrf.mxu0
      %v1056 = vadd.f32 0.0, %v1055
      %v1057 = vpop.f32.mrf.mxu0
      %1058 = vdwg.mxu0
      %v1059 = vpack.c.bf16 %v1056, %v1056
      %s1060 = scalar_lea.vmem %s10, 4
      %v1061 = vld [vmem:[%s1060] sm:$0xf]
      %v1063 = vsel %vm846, %v1059, 0
      %v1066 = vsel %vm882, %v1061, 0
      %1068 = vmatpush.bf16.msra.mxu0 0
      %1069 = vmatpush.bf16.msra.mxu0 0
      %1070 = vmatpush.bf16.msra.mxu0 0
      %1071 = vmatpush.bf16.msra.mxu0 0
      %1072 = vmatpush.bf16.msra.mxu0 0
      %1073 = vmatpush.bf16.msra.mxu0 0
      %1074 = vmatpush.bf16.msra.mxu0 0
      %1075 = vmatpush.bf16.msra.mxu0 %v1066
      %1076 = vmatmul.bf16.gmra.mxu0 %v1063
      %v1077 = vpop.f32.mrf.mxu0
      %v1078 = vadd.f32 0.0, %v1077
      %v1079 = vpop.f32.mrf.mxu0
      %1080 = vdwg.mxu0
      %v1082 = vsel %vm846, %v899, 0
      %v1085 = vsel %vm882, %v900, 0
      %1087 = vmatpush.bf16.msra.mxu0 0
      %1088 = vmatpush.bf16.msra.mxu0 0
      %1089 = vmatpush.bf16.msra.mxu0 0
      %1090 = vmatpush.bf16.msra.mxu0 0
      %1091 = vmatpush.bf16.msra.mxu0 0
      %1092 = vmatpush.bf16.msra.mxu0 0
      %1093 = vmatpush.bf16.msra.mxu0 0
      %1094 = vmatpush.bf16.msra.mxu0 %v1085
      %1095 = vmatmul.bf16.gmra.mxu0 %v1082
      %v1096 = vpop.f32.mrf.mxu0
      %v1097 = vadd.f32 %v1078, %v1096
      %v1098 = vpop.f32.mrf.mxu0
      %1099 = vdwg.mxu0
      %s1100 = scalar_lea.vmem %s4, 32
      %v1101 = vld [vmem:[%s1100] sm:$0xf]
      %v1102 = vld [vmem:[%s1100 + $0x4] sm:$0xf]
      %v1103 = vld [vmem:[%s1100 + $0x8] sm:$0xf]
      %v1104 = vld [vmem:[%s1100 + $0xc] sm:$0xf]
      %s1105 = scalar_lea.vmem %s5, 2
      %v1106 = vld [vmem:[%s1105] sm:$0x1]
      %v1108 = vperm.slane %v1106, 0
      %v1114 = vunpack.c.l.b16 %v1101
      %v1115 = vunpack.c.l.b16 %v1102
      %v1116 = vunpack.c.l.b16 %v1103
      %v1117 = vunpack.c.l.b16 %v1104
      %v1118 = vpack.c.b16 %v1115, %v1114
      %v1119 = vpack.c.b16 %v1117, %v1116
      %1122 = vmatpush.bf16.msra.mxu0 0
      %1123 = vmatpush.bf16.msra.mxu0 0
      %1124 = vmatpush.bf16.msra.mxu0 0
      %1125 = vmatpush.bf16.msra.mxu0 0
      %1126 = vmatpush.bf16.msra.mxu0 0
      %1127 = vmatpush.bf16.msra.mxu0 0
      %1128 = vmatpush.bf16.msra.mxu0 %v1119
      %1129 = vmatpush.bf16.msra.mxu0 %v1118
      %1130 = vmatmul.bf16.gmra.mxu0 %v760
      %v1131 = vpop.f32.mrf.mxu0
      %v1132 = vadd.f32 %v1108, %v1131
      %v1133 = vpop.f32.mrf.mxu0
      %1134 = vdwg.mxu0
      %s1135 = scalar_lea.vmem %s6, 32
      %v1136 = vld [vmem:[%s1135] sm:$0xf]
      %v1137 = vld [vmem:[%s1135 + $0x4] sm:$0xf]
      %v1138 = vld [vmem:[%s1135 + $0x8] sm:$0xf]
      %v1139 = vld [vmem:[%s1135 + $0xc] sm:$0xf]
      %s1140 = scalar_lea.vmem %s7, 2
      %v1141 = vld [vmem:[%s1140] sm:$0x1]
      %v1143 = vperm.slane %v1141, 0
      %v1149 = vunpack.c.l.b16 %v1136
      %v1150 = vunpack.c.l.b16 %v1137
      %v1151 = vunpack.c.l.b16 %v1138
      %v1152 = vunpack.c.l.b16 %v1139
      %v1153 = vpack.c.b16 %v1150, %v1149
      %v1154 = vpack.c.b16 %v1152, %v1151
      %1157 = vmatpush.bf16.msra.mxu0 0
      %1158 = vmatpush.bf16.msra.mxu0 0
      %1159 = vmatpush.bf16.msra.mxu0 0
      %1160 = vmatpush.bf16.msra.mxu0 0
      %1161 = vmatpush.bf16.msra.mxu0 0
      %1162 = vmatpush.bf16.msra.mxu0 0
      %1163 = vmatpush.bf16.msra.mxu0 %v1154
      %1164 = vmatpush.bf16.msra.mxu0 %v1153
      %1165 = vmatmul.bf16.gmra.mxu0 %v796
      %v1166 = vpop.f32.mrf.mxu0
      %v1167 = vadd.f32 %v1143, %v1166
      %v1168 = vpop.f32.mrf.mxu0
      %1169 = vdwg.mxu0
      %s1170 = scalar_lea.vmem %s8, 32
      %v1171 = vld [vmem:[%s1170] sm:$0xf]
      %v1172 = vld [vmem:[%s1170 + $0x4] sm:$0xf]
      %v1173 = vld [vmem:[%s1170 + $0x8] sm:$0xf]
      %v1174 = vld [vmem:[%s1170 + $0xc] sm:$0xf]
      %s1175 = scalar_lea.vmem %s9, 2
      %v1176 = vld [vmem:[%s1175] sm:$0x1]
      %v1178 = vperm.slane %v1176, 0
      %v1184 = vunpack.c.l.b16 %v1171
      %v1185 = vunpack.c.l.b16 %v1172
      %v1186 = vunpack.c.l.b16 %v1173
      %v1187 = vunpack.c.l.b16 %v1174
      %v1188 = vpack.c.b16 %v1185, %v1184
      %v1189 = vpack.c.b16 %v1187, %v1186
      %1192 = vmatpush.bf16.msra.mxu0 0
      %1193 = vmatpush.bf16.msra.mxu0 0
      %1194 = vmatpush.bf16.msra.mxu0 0
      %1195 = vmatpush.bf16.msra.mxu0 0
      %1196 = vmatpush.bf16.msra.mxu0 0
      %1197 = vmatpush.bf16.msra.mxu0 0
      %1198 = vmatpush.bf16.msra.mxu0 %v1189
      %1199 = vmatpush.bf16.msra.mxu0 %v1188
      %1200 = vmatmul.bf16.gmra.mxu0 %v796
      %v1201 = vpop.f32.mrf.mxu0
      %v1202 = vadd.f32 %v1178, %v1201
      %v1203 = vpop.f32.mrf.mxu0
      %1204 = vdwg.mxu0
      %v1205 = vpack.c.bf16 %v1132, %v1132
      %v1206 = vpack.c.bf16 %v1167, %v1167
      %v1208 = vsel %vm846, %v1205, 0
      %v1211 = vsel %vm846, %v1206, 0
      %1213 = vmatpush.bf16.xpose.msra.mxu0 0
      %1214 = vmatpush.bf16.xpose.msra.mxu0 0
      %1215 = vmatpush.bf16.xpose.msra.mxu0 0
      %1216 = vmatpush.bf16.xpose.msra.mxu0 0
      %1217 = vmatpush.bf16.xpose.msra.mxu0 0
      %1218 = vmatpush.bf16.xpose.msra.mxu0 0
      %1219 = vmatpush.bf16.xpose.msra.mxu0 0
      %1220 = vmatpush.bf16.xpose.msra.mxu0 %v1211
      %1221 = vmatmul.bf16.gmra.mxu0 %v1208
      %v1222 = vpop.f32.mrf.mxu0
      %v1223 = vadd.f32 0.0, %v1222
      %v1224 = vpop.f32.mrf.mxu0
      %1225 = vdwg.mxu0
      %v1226 = vsel %vm846, %v1223, -inf
      %1227 = vmax.xlane.f32.xlu0 %v1226
      %v1228 = vpop.xlane.xlu0 %1227
      %v1229 = vsub.f32 %v1223, %v1228
      %v1230 = vmul.f32 %v1229, 1.442695
      %v1231 = vpow.pop %v1230
      %v1232 = vsel %vm846, %v1231, 0.0
      %1233 = vadd.xlane.f32.xlu0 %v1232
      %v1234 = vpop.xlane.xlu0 %1233
      %v1235 = vrcp.pop %v1234
      %v1236 = vmul.f32 %v1231, %v1235
      %v1237 = vpack.c.bf16 %v1236, %v1236
      %v1238 = vpack.c.bf16 %v1202, %v1202
      %v1240 = vsel %vm846, %v1237, 0
      %v1243 = vsel %vm882, %v1238, 0
      %1245 = vmatpush.bf16.msra.mxu0 0
      %1246 = vmatpush.bf16.msra.mxu0 0
      %1247 = vmatpush.bf16.msra.mxu0 0
      %1248 = vmatpush.bf16.msra.mxu0 0
      %1249 = vmatpush.bf16.msra.mxu0 0
      %1250 = vmatpush.bf16.msra.mxu0 0
      %1251 = vmatpush.bf16.msra.mxu0 0
      %1252 = vmatpush.bf16.msra.mxu0 %v1243
      %1253 = vmatmul.bf16.gmra.mxu0 %v1240
      %v1254 = vpop.f32.mrf.mxu0
      %v1255 = vadd.f32 0.0, %v1254
      %v1256 = vpop.f32.mrf.mxu0
      %1257 = vdwg.mxu0
      %v1258 = vpack.c.bf16 %v1255, %v1255
      %s1259 = scalar_lea.vmem %s10, 8
      %v1260 = vld [vmem:[%s1259] sm:$0xf]
      %v1262 = vsel %vm846, %v1258, 0
      %v1265 = vsel %vm882, %v1260, 0
      %1267 = vmatpush.bf16.msra.mxu0 0
      %1268 = vmatpush.bf16.msra.mxu0 0
      %1269 = vmatpush.bf16.msra.mxu0 0
      %1270 = vmatpush.bf16.msra.mxu0 0
      %1271 = vmatpush.bf16.msra.mxu0 0
      %1272 = vmatpush.bf16.msra.mxu0 0
      %1273 = vmatpush.bf16.msra.mxu0 0
      %1274 = vmatpush.bf16.msra.mxu0 %v1265
      %1275 = vmatmul.bf16.gmra.mxu0 %v1262
      %v1276 = vpop.f32.mrf.mxu0
      %v1277 = vadd.f32 0.0, %v1276
      %v1278 = vpop.f32.mrf.mxu0
      %1279 = vdwg.mxu0
      %v1280 = vadd.f32 %v1097, %v1277
      %s1281 = scalar_lea.vmem %s4, 48
      %v1282 = vld [vmem:[%s1281] sm:$0xf]
      %v1283 = vld [vmem:[%s1281 + $0x4] sm:$0xf]
      %v1284 = vld [vmem:[%s1281 + $0x8] sm:$0xf]
      %v1285 = vld [vmem:[%s1281 + $0xc] sm:$0xf]
      %s1286 = scalar_lea.vmem %s5, 3
      %v1287 = vld [vmem:[%s1286] sm:$0x1]
      %v1289 = vperm.slane %v1287, 0
      %v1295 = vunpack.c.l.b16 %v1282
      %v1296 = vunpack.c.l.b16 %v1283
      %v1297 = vunpack.c.l.b16 %v1284
      %v1298 = vunpack.c.l.b16 %v1285
      %v1299 = vpack.c.b16 %v1296, %v1295
      %v1300 = vpack.c.b16 %v1298, %v1297
      %1303 = vmatpush.bf16.msra.mxu0 0
      %1304 = vmatpush.bf16.msra.mxu0 0
      %1305 = vmatpush.bf16.msra.mxu0 0
      %1306 = vmatpush.bf16.msra.mxu0 0
      %1307 = vmatpush.bf16.msra.mxu0 0
      %1308 = vmatpush.bf16.msra.mxu0 0
      %1309 = vmatpush.bf16.msra.mxu0 %v1300
      %1310 = vmatpush.bf16.msra.mxu0 %v1299
      %1311 = vmatmul.bf16.gmra.mxu0 %v760
      %v1312 = vpop.f32.mrf.mxu0
      %v1313 = vadd.f32 %v1289, %v1312
      %v1314 = vpop.f32.mrf.mxu0
      %1315 = vdwg.mxu0
      %s1316 = scalar_lea.vmem %s6, 48
      %v1317 = vld [vmem:[%s1316] sm:$0xf]
      %v1318 = vld [vmem:[%s1316 + $0x4] sm:$0xf]
      %v1319 = vld [vmem:[%s1316 + $0x8] sm:$0xf]
      %v1320 = vld [vmem:[%s1316 + $0xc] sm:$0xf]
      %s1321 = scalar_lea.vmem %s7, 3
      %v1322 = vld [vmem:[%s1321] sm:$0x1]
      %v1324 = vperm.slane %v1322, 0
      %v1330 = vunpack.c.l.b16 %v1317
      %v1331 = vunpack.c.l.b16 %v1318
      %v1332 = vunpack.c.l.b16 %v1319
      %v1333 = vunpack.c.l.b16 %v1320
      %v1334 = vpack.c.b16 %v1331, %v1330
      %v1335 = vpack.c.b16 %v1333, %v1332
      %1338 = vmatpush.bf16.msra.mxu0 0
      %1339 = vmatpush.bf16.msra.mxu0 0
      %1340 = vmatpush.bf16.msra.mxu0 0
      %1341 = vmatpush.bf16.msra.mxu0 0
      %1342 = vmatpush.bf16.msra.mxu0 0
      %1343 = vmatpush.bf16.msra.mxu0 0
      %1344 = vmatpush.bf16.msra.mxu0 %v1335
      %1345 = vmatpush.bf16.msra.mxu0 %v1334
      %1346 = vmatmul.bf16.gmra.mxu0 %v796
      %v1347 = vpop.f32.mrf.mxu0
      %v1348 = vadd.f32 %v1324, %v1347
      %v1349 = vpop.f32.mrf.mxu0
      %1350 = vdwg.mxu0
      %s1351 = scalar_lea.vmem %s8, 48
      %v1352 = vld [vmem:[%s1351] sm:$0xf]
      %v1353 = vld [vmem:[%s1351 + $0x4] sm:$0xf]
      %v1354 = vld [vmem:[%s1351 + $0x8] sm:$0xf]
      %v1355 = vld [vmem:[%s1351 + $0xc] sm:$0xf]
      %s1356 = scalar_lea.vmem %s9, 3
      %v1357 = vld [vmem:[%s1356] sm:$0x1]
      %v1359 = vperm.slane %v1357, 0
      %v1365 = vunpack.c.l.b16 %v1352
      %v1366 = vunpack.c.l.b16 %v1353
      %v1367 = vunpack.c.l.b16 %v1354
      %v1368 = vunpack.c.l.b16 %v1355
      %v1369 = vpack.c.b16 %v1366, %v1365
      %v1370 = vpack.c.b16 %v1368, %v1367
      %1373 = vmatpush.bf16.msra.mxu0 0
      %1374 = vmatpush.bf16.msra.mxu0 0
      %1375 = vmatpush.bf16.msra.mxu0 0
      %1376 = vmatpush.bf16.msra.mxu0 0
      %1377 = vmatpush.bf16.msra.mxu0 0
      %1378 = vmatpush.bf16.msra.mxu0 0
      %1379 = vmatpush.bf16.msra.mxu0 %v1370
      %1380 = vmatpush.bf16.msra.mxu0 %v1369
      %1381 = vmatmul.bf16.gmra.mxu0 %v796
      %v1382 = vpop.f32.mrf.mxu0
      %v1383 = vadd.f32 %v1359, %v1382
      %v1384 = vpop.f32.mrf.mxu0
      %1385 = vdwg.mxu0
      %v1386 = vpack.c.bf16 %v1313, %v1313
      %v1387 = vpack.c.bf16 %v1348, %v1348
      %v1389 = vsel %vm846, %v1386, 0
      %v1392 = vsel %vm846, %v1387, 0
      %1394 = vmatpush.bf16.xpose.msra.mxu0 0
      %1395 = vmatpush.bf16.xpose.msra.mxu0 0
      %1396 = vmatpush.bf16.xpose.msra.mxu0 0
      %1397 = vmatpush.bf16.xpose.msra.mxu0 0
      %1398 = vmatpush.bf16.xpose.msra.mxu0 0
      %1399 = vmatpush.bf16.xpose.msra.mxu0 0
      %1400 = vmatpush.bf16.xpose.msra.mxu0 0
      %1401 = vmatpush.bf16.xpose.msra.mxu0 %v1392
      %1402 = vmatmul.bf16.gmra.mxu0 %v1389
      %v1403 = vpop.f32.mrf.mxu0
      %v1404 = vadd.f32 0.0, %v1403
      %v1405 = vpop.f32.mrf.mxu0
      %1406 = vdwg.mxu0
      %v1407 = vsel %vm846, %v1404, -inf
      %1408 = vmax.xlane.f32.xlu0 %v1407
      %v1409 = vpop.xlane.xlu0 %1408
      %v1410 = vsub.f32 %v1404, %v1409
      %v1411 = vmul.f32 %v1410, 1.442695
      %v1412 = vpow.pop %v1411
      %v1413 = vsel %vm846, %v1412, 0.0
      %1414 = vadd.xlane.f32.xlu0 %v1413
      %v1415 = vpop.xlane.xlu0 %1414
      %v1416 = vrcp.pop %v1415
      %v1417 = vmul.f32 %v1412, %v1416
      %v1418 = vpack.c.bf16 %v1417, %v1417
      %v1419 = vpack.c.bf16 %v1383, %v1383
      %v1421 = vsel %vm846, %v1418, 0
      %v1424 = vsel %vm882, %v1419, 0
      %1426 = vmatpush.bf16.msra.mxu0 0
      %1427 = vmatpush.bf16.msra.mxu0 0
      %1428 = vmatpush.bf16.msra.mxu0 0
      %1429 = vmatpush.bf16.msra.mxu0 0
      %1430 = vmatpush.bf16.msra.mxu0 0
      %1431 = vmatpush.bf16.msra.mxu0 0
      %1432 = vmatpush.bf16.msra.mxu0 0
      %1433 = vmatpush.bf16.msra.mxu0 %v1424
      %1434 = vmatmul.bf16.gmra.mxu0 %v1421
      %v1435 = vpop.f32.mrf.mxu0
      %v1436 = vadd.f32 0.0, %v1435
      %v1437 = vpop.f32.mrf.mxu0
      %1438 = vdwg.mxu0
      %v1439 = vpack.c.bf16 %v1436, %v1436
      %s1440 = scalar_lea.vmem %s10, 12
      %v1441 = vld [vmem:[%s1440] sm:$0xf]
      %v1443 = vsel %vm846, %v1439, 0
      %v1446 = vsel %vm882, %v1441, 0
      %1448 = vmatpush.bf16.msra.mxu0 0
      %1449 = vmatpush.bf16.msra.mxu0 0
      %1450 = vmatpush.bf16.msra.mxu0 0
      %1451 = vmatpush.bf16.msra.mxu0 0
      %1452 = vmatpush.bf16.msra.mxu0 0
      %1453 = vmatpush.bf16.msra.mxu0 0
      %1454 = vmatpush.bf16.msra.mxu0 0
      %1455 = vmatpush.bf16.msra.mxu0 %v1446
      %1456 = vmatmul.bf16.gmra.mxu0 %v1443
      %v1457 = vpop.f32.mrf.mxu0
      %v1458 = vadd.f32 0.0, %v1457
      %v1459 = vpop.f32.mrf.mxu0
      %1460 = vdwg.mxu0
      %v1461 = vadd.f32 %v1280, %v1458
      %v1462 = vld [vmem:[%s11] sm:$0x1]
      %v1464 = vperm.slane %v1462, 0
      %v1466 = vadd.f32 %v1461, %v1464
      %v1467 = vadd.f32 %v735, %v1466
      %v1468 = vld [vmem:[%s12] sm:$0x1]
      %v1469 = vld [vmem:[%s13] sm:$0x1]
      %v1470 = vsel %vm721, %v1467, 0.0
      %1471 = vadd.xlane.f32.xlu0 %v1470
      %v1472 = vpop.xlane.xlu0 %1471
      %v1473 = vrcp.pop 32.0
      %v1474 = vmul.f32 32.0, %v1473
      %v1475 = vsub.f32 1.0, %v1474
      %v1476 = vmul.f32 %v1473, %v1475
      %v1477 = vadd.f32 %v1473, %v1476
      %vm1478 = vweird.f32 %v1473
      %v1479 = vsel %vm1478, %v1473, %v1477
      %v1480 = vmul.f32 %v1472, %v1479
      %v1481 = vsub.f32 %v1467, %v1480
      %v1482 = vmul.f32 %v1481, %v1481
      %v1483 = vsel %vm721, %v1482, 0.0
      %1484 = vadd.xlane.f32.xlu0 %v1483
      %v1485 = vpop.xlane.xlu0 %1484
      %v1486 = vmul.f32 %v1485, %v1479
      %v1487 = vadd.f32 %v1486, 1e-05
      %v1488 = vrsqrt.pop %v1487
      %v1489 = vmul.f32 %v1488, %v1487
      %v1490 = vmul.f32 %v1489, %v1488
      %v1491 = vmul.f32 0.5, %v1490
      %v1492 = vsub.f32 1.5, %v1491
      %v1493 = vmul.f32 %v1488, %v1492
      %vm1494 = vweird.f32 %v1487
      %vm1495 = vweird.f32 %v1488
      %vm1496 = vmor %vm1494, %vm1495
      %v1497 = vsel %vm1496, %v1488, %v1493
      %v1498 = vmul.f32 %v1481, %v1497
      %v1500 = vperm.slane %v1468, 0
      %v1502 = vmul.f32 %v1498, %v1500
      %v1504 = vperm.slane %v1469, 0
      %v1506 = vadd.f32 %v1502, %v1504
      %v1507 = vpack.c.bf16 %v1506, %v1506
      %v1508 = vld [vmem:[%s14] sm:$0xf]
      %v1509 = vld [vmem:[%s14 + $0x4] sm:$0xf]
      %v1510 = vld [vmem:[%s14 + $0x8] sm:$0xf]
      %v1511 = vld [vmem:[%s14 + $0xc] sm:$0xf]
      %v1512 = vld [vmem:[%s15] sm:$0x1]
      %v1514 = vperm.slane %v1512, 0
      %v1520 = vunpack.c.l.b16 %v1508
      %v1521 = vunpack.c.l.b16 %v1509
      %v1522 = vunpack.c.l.b16 %v1510
      %v1523 = vunpack.c.l.b16 %v1511
      %v1524 = vpack.c.b16 %v1521, %v1520
      %v1525 = vpack.c.b16 %v1523, %v1522
      %v1529 = vsel %vm721, %v1507, 0
      %1531 = vmatpush.bf16.msra.mxu0 0
      %1532 = vmatpush.bf16.msra.mxu0 0
      %1533 = vmatpush.bf16.msra.mxu0 0
      %1534 = vmatpush.bf16.msra.mxu0 0
      %1535 = vmatpush.bf16.msra.mxu0 0
      %1536 = vmatpush.bf16.msra.mxu0 0
      %1537 = vmatpush.bf16.msra.mxu0 %v1525
      %1538 = vmatpush.bf16.msra.mxu0 %v1524
      %1539 = vmatmul.bf16.gmra.mxu0 %v1529
      %v1540 = vpop.f32.mrf.mxu0
      %v1541 = vadd.f32 %v1514, %v1540
      %v1542 = vpop.f32.mrf.mxu0
      %1543 = vdwg.mxu0
      %v1544 = vmax.f32 %v1541, 0.0
      %v1545 = vpack.c.bf16 %v1544, %v1544
      %v1546 = vld [vmem:[%s16] sm:$0xf]
      %v1547 = vld [vmem:[%s16 + $0x4] sm:$0xf]
      %v1548 = vld [vmem:[%s16 + $0x8] sm:$0xf]
      %v1549 = vld [vmem:[%s16 + $0xc] sm:$0xf]
      %v1550 = vld [vmem:[%s17] sm:$0x1]
      %v1552 = vperm.slane %v1550, 0
      %v1558 = vunpack.c.l.b16 %v1546
      %v1559 = vunpack.c.l.b16 %v1547
      %v1560 = vunpack.c.l.b16 %v1548
      %v1561 = vunpack.c.l.b16 %v1549
      %v1562 = vpack.c.b16 %v1559, %v1558
      %v1563 = vpack.c.b16 %v1561, %v1560
      %v1567 = vsel %vm721, %v1545, 0
      %1569 = vmatpush.bf16.msra.mxu0 0
      %1570 = vmatpush.bf16.msra.mxu0 0
      %1571 = vmatpush.bf16.msra.mxu0 0
      %1572 = vmatpush.bf16.msra.mxu0 0
      %1573 = vmatpush.bf16.msra.mxu0 0
      %1574 = vmatpush.bf16.msra.mxu0 0
      %1575 = vmatpush.bf16.msra.mxu0 %v1563
      %1576 = vmatpush.bf16.msra.mxu0 %v1562
      %1577 = vmatmul.bf16.gmra.mxu0 %v1567
      %v1578 = vpop.f32.mrf.mxu0
      %v1579 = vadd.f32 %v1552, %v1578
      %v1580 = vpop.f32.mrf.mxu0
      %1581 = vdwg.mxu0
      %v1582 = vadd.f32 %v1579, %v1506
      %v1583 = vld [vmem:[%s18] sm:$0x1]
      %v1584 = vld [vmem:[%s19] sm:$0x1]
      %v1585 = vsel %vm721, %v1582, 0.0
      %1586 = vadd.xlane.f32.xlu0 %v1585
      %v1587 = vpop.xlane.xlu0 %1586
      %v1588 = vmul.f32 %v1587, %v1479
      %v1589 = vsub.f32 %v1582, %v1588
      %v1590 = vmul.f32 %v1589, %v1589
      %v1591 = vsel %vm721, %v1590, 0.0
      %1592 = vadd.xlane.f32.xlu0 %v1591
      %v1593 = vpop.xlane.xlu0 %1592
      %v1594 = vmul.f32 %v1593, %v1479
      %v1595 = vadd.f32 %v1594, 1e-05
      %v1596 = vrsqrt.pop %v1595
      %v1597 = vmul.f32 %v1596, %v1595
      %v1598 = vmul.f32 %v1597, %v1596
      %v1599 = vmul.f32 0.5, %v1598
      %v1600 = vsub.f32 1.5, %v1599
      %v1601 = vmul.f32 %v1596, %v1600
      %vm1602 = vweird.f32 %v1595
      %vm1603 = vweird.f32 %v1596
      %vm1604 = vmor %vm1602, %vm1603
      %v1605 = vsel %vm1604, %v1596, %v1601
      %v1606 = vmul.f32 %v1589, %v1605
      %v1608 = vperm.slane %v1583, 0
      %v1610 = vmul.f32 %v1606, %v1608
      %v1612 = vperm.slane %v1584, 0
      %v1614 = vadd.f32 %v1610, %v1612
      %v1615 = vld [vmem:[%s20] sm:$0x1]
      %v1617 = vperm.slane %v1615, 0
      %v1619 = vmul.f32 %v1614, %v1617
      %v1620 = vsel %vm721, %v1619, 0.0
      %1621 = vadd.xlane.f32.xlu0 %v1620
      %v1622 = vpop.xlane.xlu0 %1621
      %v1623 = vld [vmem:[#allocation2] sm:$0x1]
      %v1625 = vperm.slane %v1623, 0
      %v1627 = vadd.f32 %v1622, %v1625
      %v1628 = vxor.u32 %v1627, 2147483648
      %v1629 = vmul.f32 %v1628, 1.442695
      %v1630 = vpow.pop %v1629
      %v1631 = vadd.f32 %v1630, 1.0
      %v1632 = vrcp.pop %v1631
      %v1633 = vmul.f32 %v1631, %v1632
      %v1634 = vsub.f32 1.0, %v1633
      %v1635 = vmul.f32 %v1632, %v1634
      %v1636 = vadd.f32 %v1632, %v1635
      %vm1637 = vweird.f32 %v1631
      %vm1638 = vweird.f32 %v1632
      %vm1639 = vmor %vm1637, %vm1638
      %v1640 = vsel %vm1639, %v1632, %v1636
      %v1641 = vand.u32 2147483647, %v1631
      %vm1642 = vcmp.eq.f32.partialorder %v1641, 8.507059e+37
      %v1643 = vand.u32 %v1631, 2147483648
      %v1644 = vor.u32 1.1754944e-38, %v1643
      %v1645 = vsel %vm1642, %v1644, %v1640
      %v1646 = vmul.f32 1.0, %v1645
      %vm1647 = vcmask 7168
      %1648 = vst.msk [vmem:[%s697] sm:$0xff] %vm1647, %v1646
      %p1649 = scmp.lt.s32.totalorder %s35, 1
      %s1650 = scalar_select %p1649, %s35, 1
      %s1651 = smul.addr %s1650, 8
      %s1652 = scalar_lea.vmem %s22, %s1651
      // Predicated region
      $region109: #{tpu_custom_call.1} parent=107 // pred_check
        %p1653 = pneg %p525
      $region110: #{tpu_custom_call.1} parent=107 // pred_check_branch
        %1655 = sbr.rel (%p1653) target = $region112
      $region111: #{tpu_custom_call.1} parent=107 // pred_region
        _
      $region112: #{tpu_custom_call.1} parent=107 // pred_fallthru
        _
    $region108: #{tpu_custom_call.1} parent=5 // pred_fallthru
      _
    %p1656 = scmp.le.s32.totalorder 2, %s30
    // Predicated region
    $region113: #{tpu_custom_call.1} parent=5 // pred_check
      %p1657 = pneg %p1656
    $region114: #{tpu_custom_call.1} parent=5 // pred_check_branch
      %1659 = sbr.rel (%p1657) target = $region116
    $region115: #{tpu_custom_call.1} parent=5 // pred_region
      %s1660 = ssub.s32 %s30, 2
      // Predicated region
      $region117: #{tpu_custom_call.1} parent=115 // pred_check
        %p1661 = pneg %p531
      $region118: #{tpu_custom_call.1} parent=115 // pred_check_branch
        %1663 = sbr.rel (%p1661) target = $region120
      $region119: #{tpu_custom_call.1} parent=115 // pred_region
        %p1664 = scmp.lt.s32.totalorder %s36, 1
        %s1665 = scalar_select %p1664, %s36, 1
        %s1666 = smul.addr %s1665, 8
        %s1667 = scalar_lea.vmem %s22, %s1666
      $region120: #{tpu_custom_call.1} parent=115 // pred_fallthru
        _
    $region116: #{tpu_custom_call.1} parent=5 // pred_fallthru
      _
  $region6: #{tpu_custom_call.1} parent=0 // loop_footer
    %s34 = sadd.s32 1, %s30
  $region7: #{tpu_custom_call.1} parent=0 // loop_footer_branch
    %29 = sbr.rel target = $region3
  $region8: #{tpu_custom_call.1} parent=0 // loop_exit
    _

</llo_original>
